<compile_context>
chip_gen: v7x
topology: tpu7x:2x2x1
jax: 0.10.0
libtpu: 0.0.40
codegen_flags: <defaults>
</compile_context>

<pallas_src>
import numpy as np
import jax
import jax.numpy as jnp
from jax.experimental import pallas as pl
from jax.experimental.pallas import tpu as pltpu

EPSILON = 0.001
INPUT_SIZE = 24  # BipedalWalker observation size

X_MIN = np.array([-3.1415927, -5.0, -5.0, -5.0, -3.1415927, -5.0, -3.1415927, -5.0,
                  -0.0, -3.1415927, -5.0, -3.1415927, -5.0, -0.0,
                  -1.0, -1.0, -1.0, -1.0, -1.0, -1.0, -1.0, -1.0, -1.0, -1.0],
                 dtype=np.float32)
X_MAX = np.array([3.1415927, 5.0, 5.0, 5.0, 3.1415927, 5.0, 3.1415927, 5.0,
                  5.0, 3.1415927, 5.0, 3.1415927, 5.0, 5.0,
                  1.0, 1.0, 1.0, 1.0, 1.0, 1.0, 1.0, 1.0, 1.0, 1.0],
                 dtype=np.float32)


def _build_cov_maps():
    """Static maps for cov = L @ L^T assembled from the 10 Cholesky entries.

    Returns SL, SR (10, NP) selection matrices and A (NP, 16) accumulation matrix
    such that, with x2 the (B, 10) fc4_2 output,
        cov_flat = ((x2 @ SL) * (x2 @ SR)) @ A + EPSILON
    reproduces (L @ L^T).reshape(B, 16) exactly.
    """
    Lidx = -np.ones((4, 4), dtype=np.int64)
    Lidx[0, 0] = 0; Lidx[1, 0] = 1; Lidx[2, 0] = 2; Lidx[3, 0] = 3
    Lidx[1, 1] = 4; Lidx[2, 1] = 5; Lidx[3, 1] = 6
    Lidx[2, 2] = 7; Lidx[3, 2] = 8
    Lidx[3, 3] = 9

    pair_to_q = {}
    pairs = []
    contribs = []  # (product index q, flat cov index p)
    for i in range(4):
        for j in range(4):
            p = 4 * i + j
            for k in range(min(i, j) + 1):       # cov[i,j] = sum_k L[i,k]*L[j,k]
                m, n = int(Lidx[i, k]), int(Lidx[j, k])
                key = (min(m, n), max(m, n))
                if key not in pair_to_q:
                    pair_to_q[key] = len(pairs)
                    pairs.append(key)
                contribs.append((pair_to_q[key], p))

    np_pairs = len(pairs)                         # 20 unique pairwise products
    SL = np.zeros((10, np_pairs), np.float32)
    SR = np.zeros((10, np_pairs), np.float32)
    for q, (m, n) in enumerate(pairs):
        SL[m, q] = 1.0
        SR[n, q] = 1.0
    A = np.zeros((np_pairs, 16), np.float32)      # 0/1 entries: exact in bf16
    for q, p in contribs:
        A[q, p] += 1.0
    return SL, SR, A


_SL, _SR, _A = _build_cov_maps()
_NP = _A.shape[0]   # 20
_OUT = 4 + 16       # merged output width: mu(4) | cov16(16)


def _mlp_kernel(x_ref, w1_ref, b1_ref, w2_ref, b2_ref,
                w3_ref, b3_ref, w4_ref, b4_ref, a_ref, out_ref):
    # min-max normalization is already folded into w1/b1 (host side). fc1 in f32.
    x = x_ref[...]                                                       # (TB, 24) f32
    h = jnp.maximum(
        jnp.dot(x, w1_ref[...], preferred_element_type=jnp.float32) + b1_ref[...], 0.0)

    # fc2 / fused fc3 / fused fc4 run bf16 x bf16 -> f32 accumulate on the MXU.
    h = jnp.maximum(
        jnp.dot(h.astype(jnp.bfloat16), w2_ref[...],
                preferred_element_type=jnp.float32) + b2_ref[...], 0.0)

    # fused head entry: [relu(h@w31+b31) | relu(h@w32+b32)] -> (TB, 64)
    h12 = jnp.maximum(
        jnp.dot(h.astype(jnp.bfloat16), w3_ref[...],
                preferred_element_type=jnp.float32) + b3_ref[...], 0.0)

    # fused head exit (block-diagonal), columns [left(0:20) | right(20:40) | mu_pre(40:44)]
    out44 = jnp.dot(h12.astype(jnp.bfloat16), w4_ref[...],
                    preferred_element_type=jnp.float32) + b4_ref[...]

    left = out44[:, :_NP]                                                # (TB, 20) lane 0
    right = out44[:, _NP:2 * _NP]                                        # (TB, 20)
    mu = jnp.tanh(out44[:, 2 * _NP:2 * _NP + 4])                         # (TB, 4)

    prods = (left * right).astype(jnp.bfloat16)                          # (TB, 20)
    cov16 = jnp.dot(prods, a_ref[...],
                    preferred_element_type=jnp.float32) + EPSILON        # (TB, 16)

    # single merged, lane-flat output slab: [mu | cov16] -> one writeback stream
    out_ref[...] = jnp.concatenate([mu, cov16], axis=1).astype(out_ref.dtype)


def _num_tensorcores():
    """TensorCores per JAX device: 1 on v5e/v6e, 2 on v4/v5p/v7x (megacore / dual-TC)."""
    try:
        kind = jax.devices()[0].device_kind.lower()
    except Exception:
        return 2
    single_tc = ("v5e", "v5 lite", "v5lite", "v6e", "v6 lite", "v6lite")
    if any(t in kind for t in single_tc):
        return 1
    return 2


def _choose_tb(B, num_tc, max_tb=4096):
    """Largest batch tile that divides B, is a multiple of 8, <= max_tb, and (when
    possible) keeps grid >= num_tc so dual-TC parts shard across both cores.
    On single-TC parts this collapses to grid=(1,) with one big tile."""
    candidates = [t for t in range(8, min(B, max_tb) + 1, 8) if B % t == 0]
    if not candidates:
        return B                       # tiny/odd batch -> single full-array block
    pref = [t for t in candidates if B // t >= num_tc]
    return max(pref) if pref else max(candidates)


def _fuse_params(params):
    """Host-side folding/fusion of the 14 raw parameters into 9 kernel inputs.

    fc1 (with folded normalization) stays f32; all other matmul weights are bf16.
    Biases stay f32 (added to the f32 accumulator)."""
    (xmin, xmax, w1, b1, w2, b2,
     w31, b31, w41, b41, w32, b32, w42, b42) = params
    sl = jnp.asarray(_SL)
    sr = jnp.asarray(_SR)
    a = jnp.asarray(_A)

    # fold min-max normalization (affine) into fc1
    scale = 2.0 / (xmax - xmin)                      # (1, 24)
    offset = -xmin * scale - 1.0                     # (1, 24)
    w1f = w1 * scale.reshape(INPUT_SIZE, 1)
    b1f = b1 + offset @ w1

    # fuse fc3_1 | fc3_2
    w3f = jnp.concatenate([w31, w32], axis=1)        # (64, 64)
    b3f = jnp.concatenate([b31, b32], axis=1)        # (1, 64)

    # fuse fc4_1 | fc4_2, projecting fc4_2 onto the left/right pairwise-product
    # factors needed for L @ L^T.  Column order [left | right | mu_pre] keeps the
    # cov-matmul K operand lane-0 aligned.
    w4f = jnp.zeros((64, 2 * _NP + 4), jnp.float32)
    w4f = w4f.at[32:, :_NP].set(w42 @ sl)
    w4f = w4f.at[32:, _NP:2 * _NP].set(w42 @ sr)
    w4f = w4f.at[:32, 2 * _NP:].set(w41)
    b4f = jnp.concatenate([b42 @ sl, b42 @ sr, b41], axis=1)   # (1, 44)

    bf16 = jnp.bfloat16
    return (w1f, b1f,
            w2.astype(bf16), b2,
            w3f.astype(bf16), b3f,
            w4f.astype(bf16), b4f,
            a.astype(bf16))


def multihead_mlp_v2_forward(x, params, tb=None):
    """Pallas forward. x: (B, 24) float32. Returns (mu_hat.squeeze(), cov.squeeze())."""
    B = x.shape[0]
    if tb is None:
        tb = _choose_tb(B, _num_tensorcores())
    assert B % tb == 0, "batch must be a multiple of the batch tile"
    grid = (B // tb,)

    fused = _fuse_params(params)

    batched = lambda i: (i, 0)
    resident = lambda i: (0, 0)    # same block every step -> stays resident in VMEM

    in_specs = [pl.BlockSpec((tb, INPUT_SIZE), batched)]
    in_specs += [pl.BlockSpec(p.shape, resident) for p in fused]

    out = pl.pallas_call(
        _mlp_kernel,
        grid=grid,
        in_specs=in_specs,
        out_specs=pl.BlockSpec((tb, _OUT), batched),
        out_shape=jax.ShapeDtypeStruct((B, _OUT), jnp.float32),
        compiler_params=pltpu.CompilerParams(
            dimension_semantics=("parallel",),
            vmem_limit_bytes=32 * 1024 * 1024),
    )(x, *fused)

    mu = out[:, :4]
    cov = out[:, 4:].reshape(B, 4, 4)
    return jnp.squeeze(mu), jnp.squeeze(cov)


def init_params(key):
    """Deterministic xavier-uniform weights, biases = 0.01 (matching init_weights)."""
    def xavier(k, fan_in, fan_out):
        bound = float(np.sqrt(6.0 / (fan_in + fan_out)))
        return jax.random.uniform(k, (fan_in, fan_out), jnp.float32, -bound, bound)

    ks = jax.random.split(key, 6)
    w1 = xavier(ks[0], INPUT_SIZE, 64)
    b1 = jnp.full((1, 64), 0.01, jnp.float32)
    w2 = xavier(ks[1], 64, 64)
    b2 = jnp.full((1, 64), 0.01, jnp.float32)
    w31 = xavier(ks[2], 64, 32)
    b31 = jnp.full((1, 32), 0.01, jnp.float32)
    w41 = xavier(ks[3], 32, 4)
    b41 = jnp.full((1, 4), 0.01, jnp.float32)
    w32 = xavier(ks[4], 64, 32)
    b32 = jnp.full((1, 32), 0.01, jnp.float32)
    w42 = xavier(ks[5], 32, 10)   # 4 + 3 + 2 + 1
    b42 = jnp.full((1, 10), 0.01, jnp.float32)

    xmin = jnp.asarray(X_MIN).reshape(1, INPUT_SIZE)
    xmax = jnp.asarray(X_MAX).reshape(1, INPUT_SIZE)
    return (xmin, xmax, w1, b1, w2, b2, w31, b31, w41, b41, w32, b32, w42, b42)


def reference_forward(x, params):
    """Pure-JAX f32 reference mirroring the PyTorch forward exactly (unfused params)."""
    xmin, xmax, w1, b1, w2, b2, w31, b31, w41, b41, w32, b32, w42, b42 = params
    xn = (x - xmin) / (xmax - xmin) * 2.0 - 1.0
    h = jax.nn.relu(xn @ w1 + b1)
    h = jax.nn.relu(h @ w2 + b2)
    mu = jnp.tanh(jax.nn.relu(h @ w31 + b31) @ w41 + b41)
    x2 = jax.nn.relu(h @ w32 + b32) @ w42 + b42
    B = x.shape[0]
    c1, c2, c3, c4 = x2[:, :4], x2[:, 4:7], x2[:, 7:9], x2[:, 9:]
    L = jnp.zeros((B, 4, 4), jnp.float32)
    L = L.at[:, :, 0].set(c1)
    L = L.at[:, 1:, 1].set(c2)
    L = L.at[:, 2:, 2].set(c3)
    L = L.at[:, 3:, 3].set(c4)
    cov = jnp.einsum('bik,bjk->bij', L, L) + EPSILON
    return jnp.squeeze(mu), jnp.squeeze(cov)


if __name__ == "__main__":
    key = jax.random.PRNGKey(0)
    k_params, k_x = jax.random.split(key)

    B = 256
    params = init_params(k_params)
    # deterministic observations uniformly inside the normalization bounds
    u = jax.random.uniform(k_x, (B, INPUT_SIZE), jnp.float32)
    x = jnp.asarray(X_MIN) + u * jnp.asarray(X_MAX - X_MIN)

    mu, cov = multihead_mlp_v2_forward(x, params)
    jax.block_until_ready((mu, cov))

    mu_ref, cov_ref = reference_forward(x, params)
    assert mu.shape == (B, 4) and cov.shape == (B, 4, 4)
    # bf16 MXU operands (fc2/fc3/fc4 + cov assembly) -> loosened tolerance vs f32 ref
    assert jnp.allclose(mu, mu_ref, atol=3e-2, rtol=3e-2)
    assert jnp.allclose(cov, cov_ref, atol=3e-2, rtol=3e-2)

    print("KERNEL_OK")
</pallas_src>

<mosaic_0001>
module attributes {stable_mosaic.version = 11 : i64} {
  func.func @_mlp_kernel(%arg0: i32, %arg1: memref<128x24xf32, #tpu.memory_space<vmem>>, %arg2: memref<24x64xf32, #tpu.memory_space<vmem>>, %arg3: memref<1x64xf32, #tpu.memory_space<vmem>>, %arg4: memref<64x64xbf16, #tpu.memory_space<vmem>>, %arg5: memref<1x64xf32, #tpu.memory_space<vmem>>, %arg6: memref<64x64xbf16, #tpu.memory_space<vmem>>, %arg7: memref<1x64xf32, #tpu.memory_space<vmem>>, %arg8: memref<64x44xbf16, #tpu.memory_space<vmem>>, %arg9: memref<1x44xf32, #tpu.memory_space<vmem>>, %arg10: memref<20x16xbf16, #tpu.memory_space<vmem>>, %arg11: memref<128x20xf32, #tpu.memory_space<vmem>>) attributes {dimension_semantics = [#tpu.dimension_semantics<parallel>], iteration_bounds = array<i64: 2>, scalar_prefetch = 0 : i64, scratch_operands = 0 : i64, tpu.core_type = #tpu.core_type<tc>, window_params = [{transform_indices = @transform_0, window_bounds = array<i64: 128, 24>}, {pipeline_mode = #tpu.pipeline_mode<synchronous>, transform_indices = @transform_1, window_bounds = array<i64: 24, 64>}, {pipeline_mode = #tpu.pipeline_mode<synchronous>, transform_indices = @transform_2, window_bounds = array<i64: 1, 64>}, {pipeline_mode = #tpu.pipeline_mode<synchronous>, transform_indices = @transform_3, window_bounds = array<i64: 64, 64>}, {pipeline_mode = #tpu.pipeline_mode<synchronous>, transform_indices = @transform_4, window_bounds = array<i64: 1, 64>}, {pipeline_mode = #tpu.pipeline_mode<synchronous>, transform_indices = @transform_5, window_bounds = array<i64: 64, 64>}, {pipeline_mode = #tpu.pipeline_mode<synchronous>, transform_indices = @transform_6, window_bounds = array<i64: 1, 64>}, {pipeline_mode = #tpu.pipeline_mode<synchronous>, transform_indices = @transform_7, window_bounds = array<i64: 64, 44>}, {pipeline_mode = #tpu.pipeline_mode<synchronous>, transform_indices = @transform_8, window_bounds = array<i64: 1, 44>}, {pipeline_mode = #tpu.pipeline_mode<synchronous>, transform_indices = @transform_9, window_bounds = array<i64: 20, 16>}, {transform_indices = @transform_10, window_bounds = array<i64: 128, 20>}]} {
    %c0 = arith.constant 0 : index
    %c0_0 = arith.constant 0 : index
    %0 = vector.load %arg1[%c0, %c0_0] : memref<128x24xf32, #tpu.memory_space<vmem>>, vector<128x24xf32>
    %c0_1 = arith.constant 0 : index
    %c0_2 = arith.constant 0 : index
    %1 = vector.load %arg2[%c0_1, %c0_2] : memref<24x64xf32, #tpu.memory_space<vmem>>, vector<24x64xf32>
    %cst = arith.constant dense<0.000000e+00> : vector<128x64xf32>
    %2 = tpu.matmul %0, %1, %cst {dimension_numbers = #tpu.dot_dimension_numbers<[1], [0], [0], [1], [0, 0, 1, 1], [], []>} : vector<128x24xf32>, vector<24x64xf32>, vector<128x64xf32> -> vector<128x64xf32>
    %c0_3 = arith.constant 0 : index
    %c0_4 = arith.constant 0 : index
    %3 = vector.load %arg3[%c0_3, %c0_4] : memref<1x64xf32, #tpu.memory_space<vmem>>, vector<1x64xf32>
    %4 = vector.broadcast %3 : vector<1x64xf32> to vector<128x64xf32>
    %5 = arith.addf %2, %4 : vector<128x64xf32>
    %cst_5 = arith.constant 0.000000e+00 : f32
    %6 = vector.broadcast %cst_5 : f32 to vector<128x64xf32>
    %7 = arith.maximumf %5, %6 : vector<128x64xf32>
    %8 = arith.truncf %7 : vector<128x64xf32> to vector<128x64xbf16>
    %c0_6 = arith.constant 0 : index
    %c0_7 = arith.constant 0 : index
    %9 = vector.load %arg4[%c0_6, %c0_7] : memref<64x64xbf16, #tpu.memory_space<vmem>>, vector<64x64xbf16>
    %cst_8 = arith.constant dense<0.000000e+00> : vector<128x64xf32>
    %10 = tpu.matmul %8, %9, %cst_8 {dimension_numbers = #tpu.dot_dimension_numbers<[1], [0], [0], [1], [0, 0, 1, 1], [], []>} : vector<128x64xbf16>, vector<64x64xbf16>, vector<128x64xf32> -> vector<128x64xf32>
    %c0_9 = arith.constant 0 : index
    %c0_10 = arith.constant 0 : index
    %11 = vector.load %arg5[%c0_9, %c0_10] : memref<1x64xf32, #tpu.memory_space<vmem>>, vector<1x64xf32>
    %12 = vector.broadcast %11 : vector<1x64xf32> to vector<128x64xf32>
    %13 = arith.addf %10, %12 : vector<128x64xf32>
    %cst_11 = arith.constant 0.000000e+00 : f32
    %14 = vector.broadcast %cst_11 : f32 to vector<128x64xf32>
    %15 = arith.maximumf %13, %14 : vector<128x64xf32>
    %16 = arith.truncf %15 : vector<128x64xf32> to vector<128x64xbf16>
    %c0_12 = arith.constant 0 : index
    %c0_13 = arith.constant 0 : index
    %17 = vector.load %arg6[%c0_12, %c0_13] : memref<64x64xbf16, #tpu.memory_space<vmem>>, vector<64x64xbf16>
    %cst_14 = arith.constant dense<0.000000e+00> : vector<128x64xf32>
    %18 = tpu.matmul %16, %17, %cst_14 {dimension_numbers = #tpu.dot_dimension_numbers<[1], [0], [0], [1], [0, 0, 1, 1], [], []>} : vector<128x64xbf16>, vector<64x64xbf16>, vector<128x64xf32> -> vector<128x64xf32>
    %c0_15 = arith.constant 0 : index
    %c0_16 = arith.constant 0 : index
    %19 = vector.load %arg7[%c0_15, %c0_16] : memref<1x64xf32, #tpu.memory_space<vmem>>, vector<1x64xf32>
    %20 = vector.broadcast %19 : vector<1x64xf32> to vector<128x64xf32>
    %21 = arith.addf %18, %20 : vector<128x64xf32>
    %cst_17 = arith.constant 0.000000e+00 : f32
    %22 = vector.broadcast %cst_17 : f32 to vector<128x64xf32>
    %23 = arith.maximumf %21, %22 : vector<128x64xf32>
    %24 = arith.truncf %23 : vector<128x64xf32> to vector<128x64xbf16>
    %c0_18 = arith.constant 0 : index
    %c0_19 = arith.constant 0 : index
    %25 = vector.load %arg8[%c0_18, %c0_19] : memref<64x44xbf16, #tpu.memory_space<vmem>>, vector<64x44xbf16>
    %cst_20 = arith.constant dense<0.000000e+00> : vector<128x44xf32>
    %26 = tpu.matmul %24, %25, %cst_20 {dimension_numbers = #tpu.dot_dimension_numbers<[1], [0], [0], [1], [0, 0, 1, 1], [], []>} : vector<128x64xbf16>, vector<64x44xbf16>, vector<128x44xf32> -> vector<128x44xf32>
    %c0_21 = arith.constant 0 : index
    %c0_22 = arith.constant 0 : index
    %27 = vector.load %arg9[%c0_21, %c0_22] : memref<1x44xf32, #tpu.memory_space<vmem>>, vector<1x44xf32>
    %28 = vector.broadcast %27 : vector<1x44xf32> to vector<128x44xf32>
    %29 = arith.addf %26, %28 : vector<128x44xf32>
    %30 = vector.extract_strided_slice %29 {offsets = [0, 0], sizes = [128, 20], strides = [1, 1]} : vector<128x44xf32> to vector<128x20xf32>
    %31 = vector.extract_strided_slice %29 {offsets = [0, 20], sizes = [128, 20], strides = [1, 1]} : vector<128x44xf32> to vector<128x20xf32>
    %32 = vector.extract_strided_slice %29 {offsets = [0, 40], sizes = [128, 4], strides = [1, 1]} : vector<128x44xf32> to vector<128x4xf32>
    %33 = math.tanh %32 : vector<128x4xf32>
    %34 = arith.mulf %30, %31 : vector<128x20xf32>
    %35 = arith.truncf %34 : vector<128x20xf32> to vector<128x20xbf16>
    %c0_23 = arith.constant 0 : index
    %c0_24 = arith.constant 0 : index
    %36 = vector.load %arg10[%c0_23, %c0_24] : memref<20x16xbf16, #tpu.memory_space<vmem>>, vector<20x16xbf16>
    %cst_25 = arith.constant dense<0.000000e+00> : vector<128x16xf32>
    %37 = tpu.matmul %35, %36, %cst_25 {dimension_numbers = #tpu.dot_dimension_numbers<[1], [0], [0], [1], [0, 0, 1, 1], [], []>} : vector<128x20xbf16>, vector<20x16xbf16>, vector<128x16xf32> -> vector<128x16xf32>
    %cst_26 = arith.constant 1.000000e-03 : f32
    %38 = vector.broadcast %cst_26 : f32 to vector<128x16xf32>
    %39 = arith.addf %37, %38 : vector<128x16xf32>
    %40 = tpu.concatenate %33, %39 in 1 : vector<128x4xf32>, vector<128x16xf32> -> vector<128x20xf32>
    %c0_27 = arith.constant 0 : index
    %c0_28 = arith.constant 0 : index
    %41 = vector.load %arg11[%c0_27, %c0_28] : memref<128x20xf32, #tpu.memory_space<vmem>>, vector<128x20xf32>
    tpu.vector_store %arg11[%c0_27, %c0_28], %40 {strides = array<i32>} : memref<128x20xf32, #tpu.memory_space<vmem>>, vector<128x20xf32>,
    return
  }
  func.func @transform_0(%arg0: i32) -> (i32, i32) {
    %c0_i32 = arith.constant 0 : i32
    %c0_i32_0 = arith.constant 0 : i32
    return %arg0, %c0_i32 : i32, i32
  }
  func.func @transform_1(%arg0: i32) -> (i32, i32) {
    %c0_i32 = arith.constant 0 : i32
    %c0_i32_0 = arith.constant 0 : i32
    %c0_i32_1 = arith.constant 0 : i32
    return %c0_i32, %c0_i32_0 : i32, i32
  }
  func.func @transform_2(%arg0: i32) -> (i32, i32) {
    %c0_i32 = arith.constant 0 : i32
    %c0_i32_0 = arith.constant 0 : i32
    %c0_i32_1 = arith.constant 0 : i32
    return %c0_i32, %c0_i32_0 : i32, i32
  }
  func.func @transform_3(%arg0: i32) -> (i32, i32) {
    %c0_i32 = arith.constant 0 : i32
    %c0_i32_0 = arith.constant 0 : i32
    %c0_i32_1 = arith.constant 0 : i32
    return %c0_i32, %c0_i32_0 : i32, i32
  }
  func.func @transform_4(%arg0: i32) -> (i32, i32) {
    %c0_i32 = arith.constant 0 : i32
    %c0_i32_0 = arith.constant 0 : i32
    %c0_i32_1 = arith.constant 0 : i32
    return %c0_i32, %c0_i32_0 : i32, i32
  }
  func.func @transform_5(%arg0: i32) -> (i32, i32) {
    %c0_i32 = arith.constant 0 : i32
    %c0_i32_0 = arith.constant 0 : i32
    %c0_i32_1 = arith.constant 0 : i32
    return %c0_i32, %c0_i32_0 : i32, i32
  }
  func.func @transform_6(%arg0: i32) -> (i32, i32) {
    %c0_i32 = arith.constant 0 : i32
    %c0_i32_0 = arith.constant 0 : i32
    %c0_i32_1 = arith.constant 0 : i32
    return %c0_i32, %c0_i32_0 : i32, i32
  }
  func.func @transform_7(%arg0: i32) -> (i32, i32) {
    %c0_i32 = arith.constant 0 : i32
    %c0_i32_0 = arith.constant 0 : i32
    %c0_i32_1 = arith.constant 0 : i32
    return %c0_i32, %c0_i32_0 : i32, i32
  }
  func.func @transform_8(%arg0: i32) -> (i32, i32) {
    %c0_i32 = arith.constant 0 : i32
    %c0_i32_0 = arith.constant 0 : i32
    %c0_i32_1 = arith.constant 0 : i32
    return %c0_i32, %c0_i32_0 : i32, i32
  }
  func.func @transform_9(%arg0: i32) -> (i32, i32) {
    %c0_i32 = arith.constant 0 : i32
    %c0_i32_0 = arith.constant 0 : i32
    %c0_i32_1 = arith.constant 0 : i32
    return %c0_i32, %c0_i32_0 : i32, i32
  }
  func.func @transform_10(%arg0: i32) -> (i32, i32) {
    %c0_i32 = arith.constant 0 : i32
    %c0_i32_0 = arith.constant 0 : i32
    return %arg0, %c0_i32 : i32, i32
  }
}

</mosaic_0001>

<llo_original>
// kernel: tpu_custom_call.1
$region0: #{tpu_custom_call.1}
  #allocation0 [shape = 'u32[]', space=smem, size = 0x4, offset = 0x4, fixed_abs, tag = 'smem constant byte address 0x4 - core index']
  #allocation1 [shape = 'u32[144,128]{1,0:T(1,128)}', space=vmem, size = 0x12000, scoped, tag = 'internal scratch']
  %s0 = inlined_call_operand.vmem [shape: f32[256,24], index: 0, kind: input, shape index: {}]
  %s1 = inlined_call_operand.vmem [shape: f32[24,64], index: 1, kind: input, shape index: {}]
  %s2 = inlined_call_operand.vmem [shape: f32[1,64], index: 2, kind: input, shape index: {}]
  %s3 = inlined_call_operand.vmem [shape: bf16[64,64], index: 3, kind: input, shape index: {}]
  %s4 = inlined_call_operand.vmem [shape: f32[1,64], index: 4, kind: input, shape index: {}]
  %s5 = inlined_call_operand.vmem [shape: bf16[64,64], index: 5, kind: input, shape index: {}]
  %s6 = inlined_call_operand.vmem [shape: f32[1,64], index: 6, kind: input, shape index: {}]
  %s7 = inlined_call_operand.vmem [shape: bf16[64,44], index: 7, kind: input, shape index: {}]
  %s8 = inlined_call_operand.vmem [shape: f32[1,44], index: 8, kind: input, shape index: {}]
  %s9 = inlined_call_operand.vmem [shape: bf16[20,16], index: 9, kind: input, shape index: {}]
  %s10 = inlined_call_operand.vmem [shape: f32[256,20], index: 10, kind: output, shape index: {}]
  %s11 = sld [smem:[#allocation0]]
  $region73: #{tpu_custom_call.1} parent=0
    _
  %s13 = ssub.s32 1, %s11
  %s14 = scalar_select 0, %s13, %s11
  loop: start=0, step=1, limit=4
  $region2: #{tpu_custom_call.1} parent=0 // loop_pre_header
    _
  $region3: #{tpu_custom_call.1} parent=0 // loop_header
    %s16 = sphi 0, %s20
    %p17 = scmp.ge.s32.totalorder %s16, 4
    %s26 = sphi 0, %s28
    %s29 = sphi 0, %s26
    %s30 = sphi 0, %s29
    %s46 = sphi 0, %s30
    %s50 = sphi 0, %s50
    %s52 = sphi 0, %s50
    %s53 = sphi 0, %s52
    %s67 = sphi 0, %s53
    %s71 = sphi 0, %s71
    %s73 = sphi 0, %s71
    %s74 = sphi 0, %s73
    %s88 = sphi 0, %s74
    %s92 = sphi 0, %s92
    %s94 = sphi 0, %s92
    %s95 = sphi 0, %s94
    %s109 = sphi 0, %s95
    %s113 = sphi 0, %s113
    %s115 = sphi 0, %s113
    %s116 = sphi 0, %s115
    %s130 = sphi 0, %s116
    %s134 = sphi 0, %s134
    %s136 = sphi 0, %s134
    %s137 = sphi 0, %s136
    %s151 = sphi 0, %s137
    %s155 = sphi 0, %s155
    %s157 = sphi 0, %s155
    %s158 = sphi 0, %s157
    %s172 = sphi 0, %s158
    %s176 = sphi 0, %s176
    %s178 = sphi 0, %s176
    %s179 = sphi 0, %s178
    %s193 = sphi 0, %s179
    %s197 = sphi 0, %s197
    %s199 = sphi 0, %s197
    %s200 = sphi 0, %s199
    %s214 = sphi 0, %s200
    %s218 = sphi 0, %s218
    %s220 = sphi 0, %s218
    %s221 = sphi 0, %s220
    %s235 = sphi 0, %s221
    %s241 = sphi 0, %s243
    %s244 = sphi 0, %s241
    %s245 = sphi 0, %s244
    %s261 = sphi 0, %s245
  $region4: #{tpu_custom_call.1} parent=0 // loop_header_branch
    %19 = sbr.rel (%p17) target = $region8
  $region5: #{tpu_custom_call.1} parent=0 // loop_body
    %s21 = ssub.s32 %s16, 1
    %s22 = ssub.s32 %s16, 2
    %s23 = sadd.s32 %s16, 1
    %s24 = ssub.s32 %s16, %s23
    %p25 = scmp.eq.s32.totalorder %s24, 0
    %s27 = sadd.s32 %s26, 1
    %s28 = scalar_select %p25, %s26, %s27
    %p31 = pneg %p25
    %p32 = scmp.eq.s32.totalorder %s16, 1
    %p33 = por %p31, %p32
    %p34 = scmp.ne.s32.totalorder %s26, %s29
    %p35 = scmp.eq.s32.totalorder %s16, 0
    %p36 = por %p34, %p35
    %p37 = scmp.ne.s32.totalorder %s26, %s29
    %p38 = scmp.eq.s32.totalorder %s21, 1
    %p39 = por %p37, %p38
    %p40 = scmp.ne.s32.totalorder %s29, %s30
    %p41 = scmp.eq.s32.totalorder %s21, 0
    %p42 = por %p40, %p41
    %p43 = scmp.ne.s32.totalorder %s29, %s30
    %p44 = scmp.eq.s32.totalorder %s22, 1
    %p45 = por %p43, %p44
    %p47 = scmp.ne.s32.totalorder %s30, %s46
    %p48 = scmp.eq.s32.totalorder %s22, 0
    %p49 = por %p47, %p48
    %s51 = sadd.s32 %s50, 1
    %p54 = scmp.eq.s32.totalorder %s16, 1
    %p55 = scmp.ne.s32.totalorder %s50, %s52
    %p56 = scmp.eq.s32.totalorder %s16, 0
    %p57 = por %p55, %p56
    %p58 = scmp.ne.s32.totalorder %s50, %s52
    %p59 = scmp.eq.s32.totalorder %s21, 1
    %p60 = por %p58, %p59
    %p61 = scmp.ne.s32.totalorder %s52, %s53
    %p62 = scmp.eq.s32.totalorder %s21, 0
    %p63 = por %p61, %p62
    %p64 = scmp.ne.s32.totalorder %s52, %s53
    %p65 = scmp.eq.s32.totalorder %s22, 1
    %p66 = por %p64, %p65
    %p68 = scmp.ne.s32.totalorder %s53, %s67
    %p69 = scmp.eq.s32.totalorder %s22, 0
    %p70 = por %p68, %p69
    %s72 = sadd.s32 %s71, 1
    %p75 = scmp.eq.s32.totalorder %s16, 1
    %p76 = scmp.ne.s32.totalorder %s71, %s73
    %p77 = scmp.eq.s32.totalorder %s16, 0
    %p78 = por %p76, %p77
    %p79 = scmp.ne.s32.totalorder %s71, %s73
    %p80 = scmp.eq.s32.totalorder %s21, 1
    %p81 = por %p79, %p80
    %p82 = scmp.ne.s32.totalorder %s73, %s74
    %p83 = scmp.eq.s32.totalorder %s21, 0
    %p84 = por %p82, %p83
    %p85 = scmp.ne.s32.totalorder %s73, %s74
    %p86 = scmp.eq.s32.totalorder %s22, 1
    %p87 = por %p85, %p86
    %p89 = scmp.ne.s32.totalorder %s74, %s88
    %p90 = scmp.eq.s32.totalorder %s22, 0
    %p91 = por %p89, %p90
    %s93 = sadd.s32 %s92, 1
    %p96 = scmp.eq.s32.totalorder %s16, 1
    %p97 = scmp.ne.s32.totalorder %s92, %s94
    %p98 = scmp.eq.s32.totalorder %s16, 0
    %p99 = por %p97, %p98
    %p100 = scmp.ne.s32.totalorder %s92, %s94
    %p101 = scmp.eq.s32.totalorder %s21, 1
    %p102 = por %p100, %p101
    %p103 = scmp.ne.s32.totalorder %s94, %s95
    %p104 = scmp.eq.s32.totalorder %s21, 0
    %p105 = por %p103, %p104
    %p106 = scmp.ne.s32.totalorder %s94, %s95
    %p107 = scmp.eq.s32.totalorder %s22, 1
    %p108 = por %p106, %p107
    %p110 = scmp.ne.s32.totalorder %s95, %s109
    %p111 = scmp.eq.s32.totalorder %s22, 0
    %p112 = por %p110, %p111
    %s114 = sadd.s32 %s113, 1
    %p117 = scmp.eq.s32.totalorder %s16, 1
    %p118 = scmp.ne.s32.totalorder %s113, %s115
    %p119 = scmp.eq.s32.totalorder %s16, 0
    %p120 = por %p118, %p119
    %p121 = scmp.ne.s32.totalorder %s113, %s115
    %p122 = scmp.eq.s32.totalorder %s21, 1
    %p123 = por %p121, %p122
    %p124 = scmp.ne.s32.totalorder %s115, %s116
    %p125 = scmp.eq.s32.totalorder %s21, 0
    %p126 = por %p124, %p125
    %p127 = scmp.ne.s32.totalorder %s115, %s116
    %p128 = scmp.eq.s32.totalorder %s22, 1
    %p129 = por %p127, %p128
    %p131 = scmp.ne.s32.totalorder %s116, %s130
    %p132 = scmp.eq.s32.totalorder %s22, 0
    %p133 = por %p131, %p132
    %s135 = sadd.s32 %s134, 1
    %p138 = scmp.eq.s32.totalorder %s16, 1
    %p139 = scmp.ne.s32.totalorder %s134, %s136
    %p140 = scmp.eq.s32.totalorder %s16, 0
    %p141 = por %p139, %p140
    %p142 = scmp.ne.s32.totalorder %s134, %s136
    %p143 = scmp.eq.s32.totalorder %s21, 1
    %p144 = por %p142, %p143
    %p145 = scmp.ne.s32.totalorder %s136, %s137
    %p146 = scmp.eq.s32.totalorder %s21, 0
    %p147 = por %p145, %p146
    %p148 = scmp.ne.s32.totalorder %s136, %s137
    %p149 = scmp.eq.s32.totalorder %s22, 1
    %p150 = por %p148, %p149
    %p152 = scmp.ne.s32.totalorder %s137, %s151
    %p153 = scmp.eq.s32.totalorder %s22, 0
    %p154 = por %p152, %p153
    %s156 = sadd.s32 %s155, 1
    %p159 = scmp.eq.s32.totalorder %s16, 1
    %p160 = scmp.ne.s32.totalorder %s155, %s157
    %p161 = scmp.eq.s32.totalorder %s16, 0
    %p162 = por %p160, %p161
    %p163 = scmp.ne.s32.totalorder %s155, %s157
    %p164 = scmp.eq.s32.totalorder %s21, 1
    %p165 = por %p163, %p164
    %p166 = scmp.ne.s32.totalorder %s157, %s158
    %p167 = scmp.eq.s32.totalorder %s21, 0
    %p168 = por %p166, %p167
    %p169 = scmp.ne.s32.totalorder %s157, %s158
    %p170 = scmp.eq.s32.totalorder %s22, 1
    %p171 = por %p169, %p170
    %p173 = scmp.ne.s32.totalorder %s158, %s172
    %p174 = scmp.eq.s32.totalorder %s22, 0
    %p175 = por %p173, %p174
    %s177 = sadd.s32 %s176, 1
    %p180 = scmp.eq.s32.totalorder %s16, 1
    %p181 = scmp.ne.s32.totalorder %s176, %s178
    %p182 = scmp.eq.s32.totalorder %s16, 0
    %p183 = por %p181, %p182
    %p184 = scmp.ne.s32.totalorder %s176, %s178
    %p185 = scmp.eq.s32.totalorder %s21, 1
    %p186 = por %p184, %p185
    %p187 = scmp.ne.s32.totalorder %s178, %s179
    %p188 = scmp.eq.s32.totalorder %s21, 0
    %p189 = por %p187, %p188
    %p190 = scmp.ne.s32.totalorder %s178, %s179
    %p191 = scmp.eq.s32.totalorder %s22, 1
    %p192 = por %p190, %p191
    %p194 = scmp.ne.s32.totalorder %s179, %s193
    %p195 = scmp.eq.s32.totalorder %s22, 0
    %p196 = por %p194, %p195
    %s198 = sadd.s32 %s197, 1
    %p201 = scmp.eq.s32.totalorder %s16, 1
    %p202 = scmp.ne.s32.totalorder %s197, %s199
    %p203 = scmp.eq.s32.totalorder %s16, 0
    %p204 = por %p202, %p203
    %p205 = scmp.ne.s32.totalorder %s197, %s199
    %p206 = scmp.eq.s32.totalorder %s21, 1
    %p207 = por %p205, %p206
    %p208 = scmp.ne.s32.totalorder %s199, %s200
    %p209 = scmp.eq.s32.totalorder %s21, 0
    %p210 = por %p208, %p209
    %p211 = scmp.ne.s32.totalorder %s199, %s200
    %p212 = scmp.eq.s32.totalorder %s22, 1
    %p213 = por %p211, %p212
    %p215 = scmp.ne.s32.totalorder %s200, %s214
    %p216 = scmp.eq.s32.totalorder %s22, 0
    %p217 = por %p215, %p216
    %s219 = sadd.s32 %s218, 1
    %p222 = scmp.eq.s32.totalorder %s16, 1
    %p223 = scmp.ne.s32.totalorder %s218, %s220
    %p224 = scmp.eq.s32.totalorder %s16, 0
    %p225 = por %p223, %p224
    %p226 = scmp.ne.s32.totalorder %s218, %s220
    %p227 = scmp.eq.s32.totalorder %s21, 1
    %p228 = por %p226, %p227
    %p229 = scmp.ne.s32.totalorder %s220, %s221
    %p230 = scmp.eq.s32.totalorder %s21, 0
    %p231 = por %p229, %p230
    %p232 = scmp.ne.s32.totalorder %s220, %s221
    %p233 = scmp.eq.s32.totalorder %s22, 1
    %p234 = por %p232, %p233
    %p236 = scmp.ne.s32.totalorder %s221, %s235
    %p237 = scmp.eq.s32.totalorder %s22, 0
    %p238 = por %p236, %p237
    %s239 = ssub.s32 %s16, %s23
    %p240 = scmp.eq.s32.totalorder %s239, 0
    %s242 = sadd.s32 %s241, 1
    %s243 = scalar_select %p240, %s241, %s242
    %p246 = pneg %p240
    %p247 = scmp.eq.s32.totalorder %s16, 1
    %p248 = por %p246, %p247
    %p249 = scmp.ne.s32.totalorder %s241, %s244
    %p250 = scmp.eq.s32.totalorder %s16, 0
    %p251 = por %p249, %p250
    %p252 = scmp.ne.s32.totalorder %s241, %s244
    %p253 = scmp.eq.s32.totalorder %s21, 1
    %p254 = por %p252, %p253
    %p255 = scmp.ne.s32.totalorder %s244, %s245
    %p256 = scmp.eq.s32.totalorder %s21, 0
    %p257 = por %p255, %p256
    %p258 = scmp.ne.s32.totalorder %s244, %s245
    %p259 = scmp.eq.s32.totalorder %s22, 1
    %p260 = por %p258, %p259
    %p262 = scmp.ne.s32.totalorder %s245, %s261
    %p263 = scmp.eq.s32.totalorder %s22, 0
    %p264 = por %p262, %p263
    %p265 = scmp.le.s32.totalorder 1, %s16
    %p266 = scmp.lt.s32.totalorder %s16, 3
    %p267 = pnand %p265, %p266
    %p268 = pneg %p267
    // Predicated region
    $region9: #{tpu_custom_call.1} parent=5 // pred_check
      _
    $region10: #{tpu_custom_call.1} parent=5 // pred_check_branch
      %270 = sbr.rel (%p267) target = $region12
    $region11: #{tpu_custom_call.1} parent=5 // pred_region
      %s271 = ssub.s32 %s16, 1
      // Predicated region
      $region13: #{tpu_custom_call.1} parent=11 // pred_check
        %p272 = pneg %p63
      $region14: #{tpu_custom_call.1} parent=11 // pred_check_branch
        %274 = sbr.rel (%p272) target = $region16
      $region15: #{tpu_custom_call.1} parent=11 // pred_region
        _
      $region16: #{tpu_custom_call.1} parent=11 // pred_fallthru
        _
      // Predicated region
      $region17: #{tpu_custom_call.1} parent=11 // pred_check
        %p275 = pneg %p84
      $region18: #{tpu_custom_call.1} parent=11 // pred_check_branch
        %277 = sbr.rel (%p275) target = $region20
      $region19: #{tpu_custom_call.1} parent=11 // pred_region
        _
      $region20: #{tpu_custom_call.1} parent=11 // pred_fallthru
        _
      // Predicated region
      $region21: #{tpu_custom_call.1} parent=11 // pred_check
        %p278 = pneg %p105
      $region22: #{tpu_custom_call.1} parent=11 // pred_check_branch
        %280 = sbr.rel (%p278) target = $region24
      $region23: #{tpu_custom_call.1} parent=11 // pred_region
        _
      $region24: #{tpu_custom_call.1} parent=11 // pred_fallthru
        _
      // Predicated region
      $region25: #{tpu_custom_call.1} parent=11 // pred_check
        %p281 = pneg %p126
      $region26: #{tpu_custom_call.1} parent=11 // pred_check_branch
        %283 = sbr.rel (%p281) target = $region28
      $region27: #{tpu_custom_call.1} parent=11 // pred_region
        _
      $region28: #{tpu_custom_call.1} parent=11 // pred_fallthru
        _
      // Predicated region
      $region29: #{tpu_custom_call.1} parent=11 // pred_check
        %p284 = pneg %p147
      $region30: #{tpu_custom_call.1} parent=11 // pred_check_branch
        %286 = sbr.rel (%p284) target = $region32
      $region31: #{tpu_custom_call.1} parent=11 // pred_region
        _
      $region32: #{tpu_custom_call.1} parent=11 // pred_fallthru
        _
      // Predicated region
      $region33: #{tpu_custom_call.1} parent=11 // pred_check
        %p287 = pneg %p168
      $region34: #{tpu_custom_call.1} parent=11 // pred_check_branch
        %289 = sbr.rel (%p287) target = $region36
      $region35: #{tpu_custom_call.1} parent=11 // pred_region
        _
      $region36: #{tpu_custom_call.1} parent=11 // pred_fallthru
        _
      // Predicated region
      $region37: #{tpu_custom_call.1} parent=11 // pred_check
        %p290 = pneg %p189
      $region38: #{tpu_custom_call.1} parent=11 // pred_check_branch
        %292 = sbr.rel (%p290) target = $region40
      $region39: #{tpu_custom_call.1} parent=11 // pred_region
        _
      $region40: #{tpu_custom_call.1} parent=11 // pred_fallthru
        _
      // Predicated region
      $region41: #{tpu_custom_call.1} parent=11 // pred_check
        %p293 = pneg %p210
      $region42: #{tpu_custom_call.1} parent=11 // pred_check_branch
        %295 = sbr.rel (%p293) target = $region44
      $region43: #{tpu_custom_call.1} parent=11 // pred_region
        _
      $region44: #{tpu_custom_call.1} parent=11 // pred_fallthru
        _
      // Predicated region
      $region45: #{tpu_custom_call.1} parent=11 // pred_check
        %p296 = pneg %p231
      $region46: #{tpu_custom_call.1} parent=11 // pred_check_branch
        %298 = sbr.rel (%p296) target = $region48
      $region47: #{tpu_custom_call.1} parent=11 // pred_region
        _
      $region48: #{tpu_custom_call.1} parent=11 // pred_fallthru
        _
    $region12: #{tpu_custom_call.1} parent=5 // pred_fallthru
      _
    %p299 = scmp.lt.s32.totalorder %s16, 2
    // Predicated region
    $region49: #{tpu_custom_call.1} parent=5 // pred_check
      %p300 = pneg %p299
    $region50: #{tpu_custom_call.1} parent=5 // pred_check_branch
      %302 = sbr.rel (%p300) target = $region52
    $region51: #{tpu_custom_call.1} parent=5 // pred_region
      // Predicated region
      $region53: #{tpu_custom_call.1} parent=51 // pred_check
        %p303 = pneg %p36
      $region54: #{tpu_custom_call.1} parent=51 // pred_check_branch
        %305 = sbr.rel (%p303) target = $region56
      $region55: #{tpu_custom_call.1} parent=51 // pred_region
        %s306 = smul.u32 16, %s16
        %p307 = scmp.lt.s32.totalorder %s306, 31
        %s308 = scalar_select %p307, %s306, 31
        %s309 = smul.addr %s308, 8
        %s310 = scalar_lea.vmem %s0, %s309
        %s311 = smul.u32 16, %s16
      $region56: #{tpu_custom_call.1} parent=51 // pred_fallthru
        _
    $region52: #{tpu_custom_call.1} parent=5 // pred_fallthru
      _
    %p312 = scmp.le.s32.totalorder 1, %s16
    %p313 = scmp.lt.s32.totalorder %s16, 3
    %p314 = pnand %p312, %p313
    %p315 = pneg %p314
    // Predicated region
    $region57: #{tpu_custom_call.1} parent=5 // pred_check
      _
    $region58: #{tpu_custom_call.1} parent=5 // pred_check_branch
      %317 = sbr.rel (%p314) target = $region60
    $region59: #{tpu_custom_call.1} parent=5 // pred_region
      %s318 = ssub.s32 %s16, 1
      %s319 = smul.u32 16, %s21
      %p320 = scmp.lt.s32.totalorder %s319, 31
      %s321 = scalar_select %p320, %s319, 31
      %s322 = smul.addr %s321, 8
      %s323 = scalar_lea.vmem %s0, %s322
      %p324 = pneg %p42
      %p325 = pneg %p39
      %p326 = pneg %p63
      %p327 = pneg %p60
      %p328 = pneg %p84
      %p329 = pneg %p81
      %p330 = pneg %p105
      %p331 = pneg %p102
      %p332 = pneg %p126
      %p333 = pneg %p123
      %p334 = pneg %p147
      %p335 = pneg %p144
      %p336 = pneg %p168
      %p337 = pneg %p165
      %p338 = pneg %p189
      %p339 = pneg %p186
      %p340 = pneg %p210
      %p341 = pneg %p207
      %p342 = pneg %p231
      %p343 = pneg %p228
      %p344 = pneg %p257
      %p345 = pneg %p254
      %s346 = smul.u32 16, %s21
      %p347 = scmp.lt.s32.totalorder %s346, 31
      %s348 = scalar_select %p347, %s346, 31
      %s349 = smul.addr %s348, 8
      %s350 = scalar_lea.vmem %s10, %s349
      %s351 = smul.u32 16, %s21
      %p352 = scmp.lt.s32.totalorder %s351, 31
      %s353 = scalar_select %p352, %s351, 31
      %s354 = smul.addr %s353, 8
      %s355 = scalar_lea.vmem %s0, %s354
      %s356 = smul.u32 16, %s21
      %s357 = smul.u32 16, %s21
      %p358 = scmp.lt.s32.totalorder %s357, 31
      %s359 = scalar_select %p358, %s357, 31
      %s360 = smul.addr %s359, 8
      %s361 = scalar_lea.vmem %s10, %s360
      %s362 = smul.u32 16, %s21
      %v364 = vld [vmem:[%s355] sm:$0xff]
      %v365 = vld [vmem:[%s355 + $0x8] sm:$0xff]
      %v366 = vld [vmem:[%s355 + $0x10] sm:$0xff]
      %v367 = vld [vmem:[%s355 + $0x18] sm:$0xff]
      %v368 = vld [vmem:[%s355 + $0x20] sm:$0xff]
      %v369 = vld [vmem:[%s355 + $0x28] sm:$0xff]
      %v370 = vld [vmem:[%s355 + $0x30] sm:$0xff]
      %v371 = vld [vmem:[%s355 + $0x38] sm:$0xff]
      %v372 = vld [vmem:[%s355 + $0x40] sm:$0xff]
      %v373 = vld [vmem:[%s355 + $0x48] sm:$0xff]
      %v374 = vld [vmem:[%s355 + $0x50] sm:$0xff]
      %v375 = vld [vmem:[%s355 + $0x58] sm:$0xff]
      %v376 = vld [vmem:[%s355 + $0x60] sm:$0xff]
      %v377 = vld [vmem:[%s355 + $0x68] sm:$0xff]
      %v378 = vld [vmem:[%s355 + $0x70] sm:$0xff]
      %v379 = vld [vmem:[%s355 + $0x78] sm:$0xff]
      %v380 = vld [vmem:[%s1] sm:$0xff]
      %v381 = vld [vmem:[%s1 + $0x8] sm:$0xff]
      %v382 = vld [vmem:[%s1 + $0x10] sm:$0xff]
      %v383 = vld [vmem:[%s2] sm:$0x1]
      %v385 = vlaneseq
      %v386 = vshrl.u32 %v385, 7
      %v387 = vsub.s32 0, %v386
      %v388 = vrot.slane %v383, %v387
      %vm390 = vcmask 195584
      %v392 = vsel %vm390, %v364, 0
      %v395 = vsel %vm390, %v365, 0
      %v398 = vsel %vm390, %v366, 0
      %v401 = vsel %vm390, %v367, 0
      %v404 = vsel %vm390, %v368, 0
      %v407 = vsel %vm390, %v369, 0
      %v410 = vsel %vm390, %v370, 0
      %v413 = vsel %vm390, %v371, 0
      %v416 = vsel %vm390, %v372, 0
      %v419 = vsel %vm390, %v373, 0
      %v422 = vsel %vm390, %v374, 0
      %v425 = vsel %vm390, %v375, 0
      %v428 = vsel %vm390, %v376, 0
      %v431 = vsel %vm390, %v377, 0
      %v434 = vsel %vm390, %v378, 0
      %v437 = vsel %vm390, %v379, 0
      %439 = vmatprep.subr.mxu0 0.0
      %440 = vmatpush1.msra.mxu0 %v380
      %441 = vmatprep.subr.mxu0 0.0
      %442 = vmatpush1.msra.mxu0 %v381
      %443 = vmatprep.subr.mxu0 0.0
      %444 = vmatpush1.msra.mxu0 %v382
      %445 = vmatprep.subr.mxu0 0.0
      %446 = vmatpush1.msra.mxu0 0.0
      %447 = vmatprep.subr.mxu0 0.0
      %448 = vmatpush1.msra.mxu0 0.0
      %449 = vmatprep.subr.mxu0 0.0
      %450 = vmatpush1.msra.mxu0 0.0
      %451 = vmatprep.subr.mxu0 0.0
      %452 = vmatpush1.msra.mxu0 0.0
      %453 = vmatprep.subr.mxu0 0.0
      %454 = vmatpush1.msra.mxu0 0.0
      %455 = vmatprep.subr.mxu0 0.0
      %456 = vmatpush1.msra.mxu0 0.0
      %457 = vmatprep.subr.mxu0 0.0
      %458 = vmatpush1.msra.mxu0 0.0
      %459 = vmatprep.subr.mxu0 0.0
      %460 = vmatpush1.msra.mxu0 0.0
      %461 = vmatprep.subr.mxu0 0.0
      %462 = vmatpush1.msra.mxu0 0.0
      %463 = vmatprep.subr.mxu0 0.0
      %464 = vmatpush1.msra.mxu0 0.0
      %465 = vmatprep.subr.mxu0 0.0
      %466 = vmatpush1.msra.mxu0 0.0
      %467 = vmatprep.subr.mxu0 0.0
      %468 = vmatpush1.msra.mxu0 0.0
      %469 = vmatprep.subr.mxu0 0.0
      %470 = vmatpush1.msra.mxu0 0.0
      %471 = vmatprep.subr.mxu0 0.0
      %472 = vmatpush1.msra.mxu0 0.0
      %473 = vmatprep.subr.mxu0 0.0
      %474 = vmatpush1.msra.mxu0 0.0
      %475 = vmatprep.subr.mxu0 0.0
      %476 = vmatpush1.msra.mxu0 0.0
      %477 = vmatprep.subr.mxu0 0.0
      %478 = vmatpush1.msra.mxu0 0.0
      %479 = vmatprep.subr.mxu0 0.0
      %480 = vmatpush1.msra.mxu0 0.0
      %481 = vmatprep.subr.mxu0 0.0
      %482 = vmatpush1.msra.mxu0 0.0
      %483 = vmatprep.subr.mxu0 0.0
      %484 = vmatpush1.msra.mxu0 0.0
      %485 = vmatprep.subr.mxu0 0.0
      %486 = vmatpush1.msra.mxu0 0.0
      %487 = vmatprep.subr.mxu0 0.0
      %488 = vmatpush1.msra.mxu0 0.0
      %489 = vmatprep.subr.mxu0 0.0
      %490 = vmatpush1.msra.mxu0 0.0
      %491 = vmatprep.subr.mxu0 0.0
      %492 = vmatpush1.msra.mxu0 0.0
      %493 = vmatprep.subr.mxu0 0.0
      %494 = vmatpush1.msra.mxu0 0.0
      %495 = vmatprep.subr.mxu0 0.0
      %496 = vmatpush1.msra.mxu0 0.0
      %497 = vmatprep.subr.mxu0 0.0
      %498 = vmatpush1.msra.mxu0 0.0
      %499 = vmatprep.subr.mxu0 0.0
      %500 = vmatpush1.msra.mxu0 0.0
      %501 = vmatprep.subr.mxu0 0.0
      %502 = vmatpush1.msra.mxu0 0.0
      %503 = vmatprep.mubr.f32.mxu0 0.0
      %504 = vmatmul.mubr.f32.gmra.mrb[0].mxu0 %v392
      %v505 = vpop.f32.mrb[0].mxu0
      %v506 = vadd.f32 %v388, %v505
      %v507 = vpop.f32.mrb[0].mxu0
      %508 = vmatprep.mubr.f32.mxu0 0.0
      %509 = vmatmul.mubr.f32.gmra.mrb[0].mxu0 %v395
      %v510 = vpop.f32.mrb[0].mxu0
      %v511 = vadd.f32 %v388, %v510
      %v512 = vpop.f32.mrb[0].mxu0
      %513 = vmatprep.mubr.f32.mxu0 0.0
      %514 = vmatmul.mubr.f32.gmra.mrb[0].mxu0 %v398
      %v515 = vpop.f32.mrb[0].mxu0
      %v516 = vadd.f32 %v388, %v515
      %v517 = vpop.f32.mrb[0].mxu0
      %518 = vmatprep.mubr.f32.mxu0 0.0
      %519 = vmatmul.mubr.f32.gmra.mrb[0].mxu0 %v401
      %v520 = vpop.f32.mrb[0].mxu0
      %v521 = vadd.f32 %v388, %v520
      %v522 = vpop.f32.mrb[0].mxu0
      %523 = vmatprep.mubr.f32.mxu0 0.0
      %524 = vmatmul.mubr.f32.gmra.mrb[0].mxu0 %v404
      %v525 = vpop.f32.mrb[0].mxu0
      %v526 = vadd.f32 %v388, %v525
      %v527 = vpop.f32.mrb[0].mxu0
      %528 = vmatprep.mubr.f32.mxu0 0.0
      %529 = vmatmul.mubr.f32.gmra.mrb[0].mxu0 %v407
      %v530 = vpop.f32.mrb[0].mxu0
      %v531 = vadd.f32 %v388, %v530
      %v532 = vpop.f32.mrb[0].mxu0
      %533 = vmatprep.mubr.f32.mxu0 0.0
      %534 = vmatmul.mubr.f32.gmra.mrb[0].mxu0 %v410
      %v535 = vpop.f32.mrb[0].mxu0
      %v536 = vadd.f32 %v388, %v535
      %v537 = vpop.f32.mrb[0].mxu0
      %538 = vmatprep.mubr.f32.mxu0 0.0
      %539 = vmatmul.mubr.f32.gmra.mrb[0].mxu0 %v413
      %v540 = vpop.f32.mrb[0].mxu0
      %v541 = vadd.f32 %v388, %v540
      %v542 = vpop.f32.mrb[0].mxu0
      %543 = vmatprep.mubr.f32.mxu0 0.0
      %544 = vmatmul.mubr.f32.gmra.mrb[0].mxu0 %v416
      %v545 = vpop.f32.mrb[0].mxu0
      %v546 = vadd.f32 %v388, %v545
      %v547 = vpop.f32.mrb[0].mxu0
      %548 = vmatprep.mubr.f32.mxu0 0.0
      %549 = vmatmul.mubr.f32.gmra.mrb[0].mxu0 %v419
      %v550 = vpop.f32.mrb[0].mxu0
      %v551 = vadd.f32 %v388, %v550
      %v552 = vpop.f32.mrb[0].mxu0
      %553 = vmatprep.mubr.f32.mxu0 0.0
      %554 = vmatmul.mubr.f32.gmra.mrb[0].mxu0 %v422
      %v555 = vpop.f32.mrb[0].mxu0
      %v556 = vadd.f32 %v388, %v555
      %v557 = vpop.f32.mrb[0].mxu0
      %558 = vmatprep.mubr.f32.mxu0 0.0
      %559 = vmatmul.mubr.f32.gmra.mrb[0].mxu0 %v425
      %v560 = vpop.f32.mrb[0].mxu0
      %v561 = vadd.f32 %v388, %v560
      %v562 = vpop.f32.mrb[0].mxu0
      %563 = vmatprep.mubr.f32.mxu0 0.0
      %564 = vmatmul.mubr.f32.gmra.mrb[0].mxu0 %v428
      %v565 = vpop.f32.mrb[0].mxu0
      %v566 = vadd.f32 %v388, %v565
      %v567 = vpop.f32.mrb[0].mxu0
      %568 = vmatprep.mubr.f32.mxu0 0.0
      %569 = vmatmul.mubr.f32.gmra.mrb[0].mxu0 %v431
      %v570 = vpop.f32.mrb[0].mxu0
      %v571 = vadd.f32 %v388, %v570
      %v572 = vpop.f32.mrb[0].mxu0
      %573 = vmatprep.mubr.f32.mxu0 0.0
      %574 = vmatmul.mubr.f32.gmra.mrb[0].mxu0 %v434
      %v575 = vpop.f32.mrb[0].mxu0
      %v576 = vadd.f32 %v388, %v575
      %v577 = vpop.f32.mrb[0].mxu0
      %578 = vmatprep.mubr.f32.mxu0 0.0
      %579 = vmatmul.mubr.f32.gmra.mrb[0].mxu0 %v437
      %v580 = vpop.f32.mrb[0].mxu0
      %v581 = vadd.f32 %v388, %v580
      %v582 = vpop.f32.mrb[0].mxu0
      %583 = vdwg.mxu0
      %v584 = vmax.f32 %v506, 0.0
      %v585 = vmax.f32 %v511, 0.0
      %v586 = vmax.f32 %v516, 0.0
      %v587 = vmax.f32 %v521, 0.0
      %v588 = vmax.f32 %v526, 0.0
      %v589 = vmax.f32 %v531, 0.0
      %v590 = vmax.f32 %v536, 0.0
      %v591 = vmax.f32 %v541, 0.0
      %v592 = vmax.f32 %v546, 0.0
      %v593 = vmax.f32 %v551, 0.0
      %v594 = vmax.f32 %v556, 0.0
      %v595 = vmax.f32 %v561, 0.0
      %v596 = vmax.f32 %v566, 0.0
      %v597 = vmax.f32 %v571, 0.0
      %v598 = vmax.f32 %v576, 0.0
      %v599 = vmax.f32 %v581, 0.0
      %v600 = vpack.c.bf16 %v585, %v584
      %v601 = vpack.c.bf16 %v587, %v586
      %v602 = vpack.c.bf16 %v589, %v588
      %v603 = vpack.c.bf16 %v591, %v590
      %v604 = vpack.c.bf16 %v593, %v592
      %v605 = vpack.c.bf16 %v595, %v594
      %v606 = vpack.c.bf16 %v597, %v596
      %v607 = vpack.c.bf16 %v599, %v598
      %v608 = vld [vmem:[%s3] sm:$0xf]
      %v609 = vld [vmem:[%s3 + $0x4] sm:$0xf]
      %v610 = vld [vmem:[%s3 + $0x8] sm:$0xf]
      %v611 = vld [vmem:[%s3 + $0xc] sm:$0xf]
      %v612 = vld [vmem:[%s3 + $0x10] sm:$0xf]
      %v613 = vld [vmem:[%s3 + $0x14] sm:$0xf]
      %v614 = vld [vmem:[%s3 + $0x18] sm:$0xf]
      %v615 = vld [vmem:[%s3 + $0x1c] sm:$0xf]
      %v616 = vld [vmem:[%s4] sm:$0x1]
      %v618 = vlaneseq
      %v619 = vshrl.u32 %v618, 7
      %v620 = vsub.s32 0, %v619
      %v621 = vrot.slane %v616, %v620
      %v631 = vunpack.c.l.b16 %v608
      %v632 = vunpack.c.l.b16 %v609
      %v633 = vunpack.c.l.b16 %v610
      %v634 = vunpack.c.l.b16 %v611
      %v635 = vunpack.c.l.b16 %v612
      %v636 = vunpack.c.l.b16 %v613
      %v637 = vunpack.c.l.b16 %v614
      %v638 = vunpack.c.l.b16 %v615
      %v639 = vpack.c.b16 %v632, %v631
      %v640 = vpack.c.b16 %v634, %v633
      %v641 = vpack.c.b16 %v636, %v635
      %v642 = vpack.c.b16 %v638, %v637
      %vm647 = vcmask 523264
      %v649 = vsel %vm647, %v600, 0
      %v652 = vsel %vm647, %v601, 0
      %v655 = vsel %vm647, %v602, 0
      %v658 = vsel %vm647, %v603, 0
      %v661 = vsel %vm647, %v604, 0
      %v664 = vsel %vm647, %v605, 0
      %v667 = vsel %vm647, %v606, 0
      %v670 = vsel %vm647, %v607, 0
      %672 = vmatprep.subr.bf16.mxu0 0
      %673 = vmatpush1.bf16.msra.mxu0 %v639
      %674 = vmatprep.subr.bf16.mxu0 0
      %675 = vmatpush1.bf16.msra.mxu0 %v640
      %676 = vmatprep.subr.bf16.mxu0 0
      %677 = vmatpush1.bf16.msra.mxu0 %v641
      %678 = vmatprep.subr.bf16.mxu0 0
      %679 = vmatpush1.bf16.msra.mxu0 %v642
      %680 = vmatprep.subr.bf16.mxu0 0
      %681 = vmatpush1.bf16.msra.mxu0 0
      %682 = vmatprep.subr.bf16.mxu0 0
      %683 = vmatpush1.bf16.msra.mxu0 0
      %684 = vmatprep.subr.bf16.mxu0 0
      %685 = vmatpush1.bf16.msra.mxu0 0
      %686 = vmatprep.subr.bf16.mxu0 0
      %687 = vmatpush1.bf16.msra.mxu0 0
      %688 = vmatprep.subr.bf16.mxu0 0
      %689 = vmatpush1.bf16.msra.mxu0 0
      %690 = vmatprep.subr.bf16.mxu0 0
      %691 = vmatpush1.bf16.msra.mxu0 0
      %692 = vmatprep.subr.bf16.mxu0 0
      %693 = vmatpush1.bf16.msra.mxu0 0
      %694 = vmatprep.subr.bf16.mxu0 0
      %695 = vmatpush1.bf16.msra.mxu0 0
      %696 = vmatprep.subr.bf16.mxu0 0
      %697 = vmatpush1.bf16.msra.mxu0 0
      %698 = vmatprep.subr.bf16.mxu0 0
      %699 = vmatpush1.bf16.msra.mxu0 0
      %700 = vmatprep.subr.bf16.mxu0 0
      %701 = vmatpush1.bf16.msra.mxu0 0
      %702 = vmatprep.subr.bf16.mxu0 0
      %703 = vmatpush1.bf16.msra.mxu0 0
      %704 = vmatprep.mubr.bf16.mxu0 0
      %705 = vmatmul.mubr.bf16.gmra.mrb[0].mxu0 %v649
      %v706 = vpop.f32.mrb[0].mxu0
      %v707 = vadd.f32 %v621, %v706
      %v708 = vpop.f32.mrb[0].mxu0
      %v709 = vpop.f32.mrb[0].mxu0
      %v710 = vadd.f32 %v621, %v709
      %v711 = vpop.f32.mrb[0].mxu0
      %712 = vmatprep.mubr.bf16.mxu0 0
      %713 = vmatmul.mubr.bf16.gmra.mrb[0].mxu0 %v652
      %v714 = vpop.f32.mrb[0].mxu0
      %v715 = vadd.f32 %v621, %v714
      %v716 = vpop.f32.mrb[0].mxu0
      %v717 = vpop.f32.mrb[0].mxu0
      %v718 = vadd.f32 %v621, %v717
      %v719 = vpop.f32.mrb[0].mxu0
      %720 = vmatprep.mubr.bf16.mxu0 0
      %721 = vmatmul.mubr.bf16.gmra.mrb[0].mxu0 %v655
      %v722 = vpop.f32.mrb[0].mxu0
      %v723 = vadd.f32 %v621, %v722
      %v724 = vpop.f32.mrb[0].mxu0
      %v725 = vpop.f32.mrb[0].mxu0
      %v726 = vadd.f32 %v621, %v725
      %v727 = vpop.f32.mrb[0].mxu0
      %728 = vmatprep.mubr.bf16.mxu0 0
      %729 = vmatmul.mubr.bf16.gmra.mrb[0].mxu0 %v658
      %v730 = vpop.f32.mrb[0].mxu0
      %v731 = vadd.f32 %v621, %v730
      %v732 = vpop.f32.mrb[0].mxu0
      %v733 = vpop.f32.mrb[0].mxu0
      %v734 = vadd.f32 %v621, %v733
      %v735 = vpop.f32.mrb[0].mxu0
      %736 = vmatprep.mubr.bf16.mxu0 0
      %737 = vmatmul.mubr.bf16.gmra.mrb[0].mxu0 %v661
      %v738 = vpop.f32.mrb[0].mxu0
      %v739 = vadd.f32 %v621, %v738
      %v740 = vpop.f32.mrb[0].mxu0
      %v741 = vpop.f32.mrb[0].mxu0
      %v742 = vadd.f32 %v621, %v741
      %v743 = vpop.f32.mrb[0].mxu0
      %744 = vmatprep.mubr.bf16.mxu0 0
      %745 = vmatmul.mubr.bf16.gmra.mrb[0].mxu0 %v664
      %v746 = vpop.f32.mrb[0].mxu0
      %v747 = vadd.f32 %v621, %v746
      %v748 = vpop.f32.mrb[0].mxu0
      %v749 = vpop.f32.mrb[0].mxu0
      %v750 = vadd.f32 %v621, %v749
      %v751 = vpop.f32.mrb[0].mxu0
      %752 = vmatprep.mubr.bf16.mxu0 0
      %753 = vmatmul.mubr.bf16.gmra.mrb[0].mxu0 %v667
      %v754 = vpop.f32.mrb[0].mxu0
      %v755 = vadd.f32 %v621, %v754
      %v756 = vpop.f32.mrb[0].mxu0
      %v757 = vpop.f32.mrb[0].mxu0
      %v758 = vadd.f32 %v621, %v757
      %v759 = vpop.f32.mrb[0].mxu0
      %760 = vmatprep.mubr.bf16.mxu0 0
      %761 = vmatmul.mubr.bf16.gmra.mrb[0].mxu0 %v670
      %v762 = vpop.f32.mrb[0].mxu0
      %v763 = vadd.f32 %v621, %v762
      %v764 = vpop.f32.mrb[0].mxu0
      %v765 = vpop.f32.mrb[0].mxu0
      %v766 = vadd.f32 %v621, %v765
      %v767 = vpop.f32.mrb[0].mxu0
      %768 = vdwg.mxu0
      %v769 = vmax.f32 %v707, 0.0
      %v770 = vmax.f32 %v710, 0.0
      %v771 = vmax.f32 %v715, 0.0
      %v772 = vmax.f32 %v718, 0.0
      %v773 = vmax.f32 %v723, 0.0
      %v774 = vmax.f32 %v726, 0.0
      %v775 = vmax.f32 %v731, 0.0
      %v776 = vmax.f32 %v734, 0.0
      %v777 = vmax.f32 %v739, 0.0
      %v778 = vmax.f32 %v742, 0.0
      %v779 = vmax.f32 %v747, 0.0
      %v780 = vmax.f32 %v750, 0.0
      %v781 = vmax.f32 %v755, 0.0
      %v782 = vmax.f32 %v758, 0.0
      %v783 = vmax.f32 %v763, 0.0
      %v784 = vmax.f32 %v766, 0.0
      %v785 = vpack.c.bf16 %v770, %v769
      %v786 = vpack.c.bf16 %v772, %v771
      %v787 = vpack.c.bf16 %v774, %v773
      %v788 = vpack.c.bf16 %v776, %v775
      %v789 = vpack.c.bf16 %v778, %v777
      %v790 = vpack.c.bf16 %v780, %v779
      %v791 = vpack.c.bf16 %v782, %v781
      %v792 = vpack.c.bf16 %v784, %v783
      %v793 = vld [vmem:[%s5] sm:$0xf]
      %v794 = vld [vmem:[%s5 + $0x4] sm:$0xf]
      %v795 = vld [vmem:[%s5 + $0x8] sm:$0xf]
      %v796 = vld [vmem:[%s5 + $0xc] sm:$0xf]
      %v797 = vld [vmem:[%s5 + $0x10] sm:$0xf]
      %v798 = vld [vmem:[%s5 + $0x14] sm:$0xf]
      %v799 = vld [vmem:[%s5 + $0x18] sm:$0xf]
      %v800 = vld [vmem:[%s5 + $0x1c] sm:$0xf]
      %v801 = vld [vmem:[%s6] sm:$0x1]
      %v803 = vlaneseq
      %v804 = vshrl.u32 %v803, 7
      %v805 = vsub.s32 0, %v804
      %v806 = vrot.slane %v801, %v805
      %v816 = vunpack.c.l.b16 %v793
      %v817 = vunpack.c.l.b16 %v794
      %v818 = vunpack.c.l.b16 %v795
      %v819 = vunpack.c.l.b16 %v796
      %v820 = vunpack.c.l.b16 %v797
      %v821 = vunpack.c.l.b16 %v798
      %v822 = vunpack.c.l.b16 %v799
      %v823 = vunpack.c.l.b16 %v800
      %v824 = vpack.c.b16 %v817, %v816
      %v825 = vpack.c.b16 %v819, %v818
      %v826 = vpack.c.b16 %v821, %v820
      %v827 = vpack.c.b16 %v823, %v822
      %v833 = vsel %vm647, %v785, 0
      %v836 = vsel %vm647, %v786, 0
      %v839 = vsel %vm647, %v787, 0
      %v842 = vsel %vm647, %v788, 0
      %v845 = vsel %vm647, %v789, 0
      %v848 = vsel %vm647, %v790, 0
      %v851 = vsel %vm647, %v791, 0
      %v854 = vsel %vm647, %v792, 0
      %856 = vmatprep.subr.bf16.mxu0 0
      %857 = vmatpush1.bf16.msra.mxu0 %v824
      %858 = vmatprep.subr.bf16.mxu0 0
      %859 = vmatpush1.bf16.msra.mxu0 %v825
      %860 = vmatprep.subr.bf16.mxu0 0
      %861 = vmatpush1.bf16.msra.mxu0 %v826
      %862 = vmatprep.subr.bf16.mxu0 0
      %863 = vmatpush1.bf16.msra.mxu0 %v827
      %864 = vmatprep.subr.bf16.mxu0 0
      %865 = vmatpush1.bf16.msra.mxu0 0
      %866 = vmatprep.subr.bf16.mxu0 0
      %867 = vmatpush1.bf16.msra.mxu0 0
      %868 = vmatprep.subr.bf16.mxu0 0
      %869 = vmatpush1.bf16.msra.mxu0 0
      %870 = vmatprep.subr.bf16.mxu0 0
      %871 = vmatpush1.bf16.msra.mxu0 0
      %872 = vmatprep.subr.bf16.mxu0 0
      %873 = vmatpush1.bf16.msra.mxu0 0
      %874 = vmatprep.subr.bf16.mxu0 0
      %875 = vmatpush1.bf16.msra.mxu0 0
      %876 = vmatprep.subr.bf16.mxu0 0
      %877 = vmatpush1.bf16.msra.mxu0 0
      %878 = vmatprep.subr.bf16.mxu0 0
      %879 = vmatpush1.bf16.msra.mxu0 0
      %880 = vmatprep.subr.bf16.mxu0 0
      %881 = vmatpush1.bf16.msra.mxu0 0
      %882 = vmatprep.subr.bf16.mxu0 0
      %883 = vmatpush1.bf16.msra.mxu0 0
      %884 = vmatprep.subr.bf16.mxu0 0
      %885 = vmatpush1.bf16.msra.mxu0 0
      %886 = vmatprep.subr.bf16.mxu0 0
      %887 = vmatpush1.bf16.msra.mxu0 0
      %888 = vmatprep.mubr.bf16.mxu0 0
      %889 = vmatmul.mubr.bf16.gmra.mrb[0].mxu0 %v833
      %v890 = vpop.f32.mrb[0].mxu0
      %v891 = vadd.f32 %v806, %v890
      %v892 = vpop.f32.mrb[0].mxu0
      %v893 = vpop.f32.mrb[0].mxu0
      %v894 = vadd.f32 %v806, %v893
      %v895 = vpop.f32.mrb[0].mxu0
      %896 = vmatprep.mubr.bf16.mxu0 0
      %897 = vmatmul.mubr.bf16.gmra.mrb[0].mxu0 %v836
      %v898 = vpop.f32.mrb[0].mxu0
      %v899 = vadd.f32 %v806, %v898
      %v900 = vpop.f32.mrb[0].mxu0
      %v901 = vpop.f32.mrb[0].mxu0
      %v902 = vadd.f32 %v806, %v901
      %v903 = vpop.f32.mrb[0].mxu0
      %904 = vmatprep.mubr.bf16.mxu0 0
      %905 = vmatmul.mubr.bf16.gmra.mrb[0].mxu0 %v839
      %v906 = vpop.f32.mrb[0].mxu0
      %v907 = vadd.f32 %v806, %v906
      %v908 = vpop.f32.mrb[0].mxu0
      %v909 = vpop.f32.mrb[0].mxu0
      %v910 = vadd.f32 %v806, %v909
      %v911 = vpop.f32.mrb[0].mxu0
      %912 = vmatprep.mubr.bf16.mxu0 0
      %913 = vmatmul.mubr.bf16.gmra.mrb[0].mxu0 %v842
      %v914 = vpop.f32.mrb[0].mxu0
      %v915 = vadd.f32 %v806, %v914
      %v916 = vpop.f32.mrb[0].mxu0
      %v917 = vpop.f32.mrb[0].mxu0
      %v918 = vadd.f32 %v806, %v917
      %v919 = vpop.f32.mrb[0].mxu0
      %920 = vmatprep.mubr.bf16.mxu0 0
      %921 = vmatmul.mubr.bf16.gmra.mrb[0].mxu0 %v845
      %v922 = vpop.f32.mrb[0].mxu0
      %v923 = vadd.f32 %v806, %v922
      %v924 = vpop.f32.mrb[0].mxu0
      %v925 = vpop.f32.mrb[0].mxu0
      %v926 = vadd.f32 %v806, %v925
      %v927 = vpop.f32.mrb[0].mxu0
      %928 = vmatprep.mubr.bf16.mxu0 0
      %929 = vmatmul.mubr.bf16.gmra.mrb[0].mxu0 %v848
      %v930 = vpop.f32.mrb[0].mxu0
      %v931 = vadd.f32 %v806, %v930
      %v932 = vpop.f32.mrb[0].mxu0
      %v933 = vpop.f32.mrb[0].mxu0
      %v934 = vadd.f32 %v806, %v933
      %v935 = vpop.f32.mrb[0].mxu0
      %936 = vmatprep.mubr.bf16.mxu0 0
      %937 = vmatmul.mubr.bf16.gmra.mrb[0].mxu0 %v851
      %v938 = vpop.f32.mrb[0].mxu0
      %v939 = vadd.f32 %v806, %v938
      %v940 = vpop.f32.mrb[0].mxu0
      %v941 = vpop.f32.mrb[0].mxu0
      %v942 = vadd.f32 %v806, %v941
      %v943 = vpop.f32.mrb[0].mxu0
      %944 = vmatprep.mubr.bf16.mxu0 0
      %945 = vmatmul.mubr.bf16.gmra.mrb[0].mxu0 %v854
      %v946 = vpop.f32.mrb[0].mxu0
      %v947 = vadd.f32 %v806, %v946
      %v948 = vpop.f32.mrb[0].mxu0
      %v949 = vpop.f32.mrb[0].mxu0
      %v950 = vadd.f32 %v806, %v949
      %v951 = vpop.f32.mrb[0].mxu0
      %952 = vdwg.mxu0
      %v953 = vmax.f32 %v891, 0.0
      %v954 = vmax.f32 %v894, 0.0
      %v955 = vmax.f32 %v899, 0.0
      %v956 = vmax.f32 %v902, 0.0
      %v957 = vmax.f32 %v907, 0.0
      %v958 = vmax.f32 %v910, 0.0
      %v959 = vmax.f32 %v915, 0.0
      %v960 = vmax.f32 %v918, 0.0
      %v961 = vmax.f32 %v923, 0.0
      %v962 = vmax.f32 %v926, 0.0
      %v963 = vmax.f32 %v931, 0.0
      %v964 = vmax.f32 %v934, 0.0
      %v965 = vmax.f32 %v939, 0.0
      %v966 = vmax.f32 %v942, 0.0
      %v967 = vmax.f32 %v947, 0.0
      %v968 = vmax.f32 %v950, 0.0
      %v969 = vpack.c.bf16 %v954, %v953
      %v970 = vpack.c.bf16 %v956, %v955
      %v971 = vpack.c.bf16 %v958, %v957
      %v972 = vpack.c.bf16 %v960, %v959
      %v973 = vpack.c.bf16 %v962, %v961
      %v974 = vpack.c.bf16 %v964, %v963
      %v975 = vpack.c.bf16 %v966, %v965
      %v976 = vpack.c.bf16 %v968, %v967
      %v977 = vld [vmem:[%s7] sm:$0xf]
      %v978 = vld [vmem:[%s7 + $0x4] sm:$0xf]
      %v979 = vld [vmem:[%s7 + $0x8] sm:$0xf]
      %v980 = vld [vmem:[%s7 + $0xc] sm:$0xf]
      %v981 = vld [vmem:[%s7 + $0x10] sm:$0xf]
      %v982 = vld [vmem:[%s7 + $0x14] sm:$0xf]
      %v983 = vld [vmem:[%s7 + $0x18] sm:$0xf]
      %v984 = vld [vmem:[%s7 + $0x1c] sm:$0xf]
      %v985 = vld [vmem:[%s8] sm:$0x1]
      %v987 = vlaneseq
      %v988 = vshrl.u32 %v987, 7
      %v989 = vsub.s32 0, %v988
      %v990 = vrot.slane %v985, %v989
      %v1000 = vunpack.c.l.b16 %v977
      %v1001 = vunpack.c.l.b16 %v978
      %v1002 = vunpack.c.l.b16 %v979
      %v1003 = vunpack.c.l.b16 %v980
      %v1004 = vunpack.c.l.b16 %v981
      %v1005 = vunpack.c.l.b16 %v982
      %v1006 = vunpack.c.l.b16 %v983
      %v1007 = vunpack.c.l.b16 %v984
      %v1008 = vpack.c.b16 %v1001, %v1000
      %v1009 = vpack.c.b16 %v1003, %v1002
      %v1010 = vpack.c.b16 %v1005, %v1004
      %v1011 = vpack.c.b16 %v1007, %v1006
      %v1017 = vsel %vm647, %v969, 0
      %v1020 = vsel %vm647, %v970, 0
      %v1023 = vsel %vm647, %v971, 0
      %v1026 = vsel %vm647, %v972, 0
      %v1029 = vsel %vm647, %v973, 0
      %v1032 = vsel %vm647, %v974, 0
      %v1035 = vsel %vm647, %v975, 0
      %v1038 = vsel %vm647, %v976, 0
      %1040 = vmatprep.subr.bf16.mxu0 0
      %1041 = vmatpush1.bf16.msra.mxu0 %v1008
      %1042 = vmatprep.subr.bf16.mxu0 0
      %1043 = vmatpush1.bf16.msra.mxu0 %v1009
      %1044 = vmatprep.subr.bf16.mxu0 0
      %1045 = vmatpush1.bf16.msra.mxu0 %v1010
      %1046 = vmatprep.subr.bf16.mxu0 0
      %1047 = vmatpush1.bf16.msra.mxu0 %v1011
      %1048 = vmatprep.subr.bf16.mxu0 0
      %1049 = vmatpush1.bf16.msra.mxu0 0
      %1050 = vmatprep.subr.bf16.mxu0 0
      %1051 = vmatpush1.bf16.msra.mxu0 0
      %1052 = vmatprep.subr.bf16.mxu0 0
      %1053 = vmatpush1.bf16.msra.mxu0 0
      %1054 = vmatprep.subr.bf16.mxu0 0
      %1055 = vmatpush1.bf16.msra.mxu0 0
      %1056 = vmatprep.subr.bf16.mxu0 0
      %1057 = vmatpush1.bf16.msra.mxu0 0
      %1058 = vmatprep.subr.bf16.mxu0 0
      %1059 = vmatpush1.bf16.msra.mxu0 0
      %1060 = vmatprep.subr.bf16.mxu0 0
      %1061 = vmatpush1.bf16.msra.mxu0 0
      %1062 = vmatprep.subr.bf16.mxu0 0
      %1063 = vmatpush1.bf16.msra.mxu0 0
      %1064 = vmatprep.subr.bf16.mxu0 0
      %1065 = vmatpush1.bf16.msra.mxu0 0
      %1066 = vmatprep.subr.bf16.mxu0 0
      %1067 = vmatpush1.bf16.msra.mxu0 0
      %1068 = vmatprep.subr.bf16.mxu0 0
      %1069 = vmatpush1.bf16.msra.mxu0 0
      %1070 = vmatprep.subr.bf16.mxu0 0
      %1071 = vmatpush1.bf16.msra.mxu0 0
      %1072 = vmatprep.mubr.bf16.mxu0 0
      %1073 = vmatmul.mubr.bf16.gmra.mrb[0].mxu0 %v1017
      %v1074 = vpop.f32.mrb[0].mxu0
      %v1075 = vadd.f32 %v990, %v1074
      %v1076 = vpop.f32.mrb[0].mxu0
      %v1077 = vpop.f32.mrb[0].mxu0
      %v1078 = vadd.f32 %v990, %v1077
      %v1079 = vpop.f32.mrb[0].mxu0
      %1080 = vmatprep.mubr.bf16.mxu0 0
      %1081 = vmatmul.mubr.bf16.gmra.mrb[0].mxu0 %v1020
      %v1082 = vpop.f32.mrb[0].mxu0
      %v1083 = vadd.f32 %v990, %v1082
      %v1084 = vpop.f32.mrb[0].mxu0
      %v1085 = vpop.f32.mrb[0].mxu0
      %v1086 = vadd.f32 %v990, %v1085
      %v1087 = vpop.f32.mrb[0].mxu0
      %1088 = vmatprep.mubr.bf16.mxu0 0
      %1089 = vmatmul.mubr.bf16.gmra.mrb[0].mxu0 %v1023
      %v1090 = vpop.f32.mrb[0].mxu0
      %v1091 = vadd.f32 %v990, %v1090
      %v1092 = vpop.f32.mrb[0].mxu0
      %v1093 = vpop.f32.mrb[0].mxu0
      %v1094 = vadd.f32 %v990, %v1093
      %v1095 = vpop.f32.mrb[0].mxu0
      %1096 = vmatprep.mubr.bf16.mxu0 0
      %1097 = vmatmul.mubr.bf16.gmra.mrb[0].mxu0 %v1026
      %v1098 = vpop.f32.mrb[0].mxu0
      %v1099 = vadd.f32 %v990, %v1098
      %v1100 = vpop.f32.mrb[0].mxu0
      %v1101 = vpop.f32.mrb[0].mxu0
      %v1102 = vadd.f32 %v990, %v1101
      %v1103 = vpop.f32.mrb[0].mxu0
      %1104 = vmatprep.mubr.bf16.mxu0 0
      %1105 = vmatmul.mubr.bf16.gmra.mrb[0].mxu0 %v1029
      %v1106 = vpop.f32.mrb[0].mxu0
      %v1107 = vadd.f32 %v990, %v1106
      %v1108 = vpop.f32.mrb[0].mxu0
      %v1109 = vpop.f32.mrb[0].mxu0
      %v1110 = vadd.f32 %v990, %v1109
      %v1111 = vpop.f32.mrb[0].mxu0
      %1112 = vmatprep.mubr.bf16.mxu0 0
      %1113 = vmatmul.mubr.bf16.gmra.mrb[0].mxu0 %v1032
      %v1114 = vpop.f32.mrb[0].mxu0
      %v1115 = vadd.f32 %v990, %v1114
      %v1116 = vpop.f32.mrb[0].mxu0
      %v1117 = vpop.f32.mrb[0].mxu0
      %v1118 = vadd.f32 %v990, %v1117
      %v1119 = vpop.f32.mrb[0].mxu0
      %1120 = vmatprep.mubr.bf16.mxu0 0
      %1121 = vmatmul.mubr.bf16.gmra.mrb[0].mxu0 %v1035
      %v1122 = vpop.f32.mrb[0].mxu0
      %v1123 = vadd.f32 %v990, %v1122
      %v1124 = vpop.f32.mrb[0].mxu0
      %v1125 = vpop.f32.mrb[0].mxu0
      %v1126 = vadd.f32 %v990, %v1125
      %v1127 = vpop.f32.mrb[0].mxu0
      %1128 = vmatprep.mubr.bf16.mxu0 0
      %1129 = vmatmul.mubr.bf16.gmra.mrb[0].mxu0 %v1038
      %v1130 = vpop.f32.mrb[0].mxu0
      %v1131 = vadd.f32 %v990, %v1130
      %v1132 = vpop.f32.mrb[0].mxu0
      %v1133 = vpop.f32.mrb[0].mxu0
      %v1134 = vadd.f32 %v990, %v1133
      %v1135 = vpop.f32.mrb[0].mxu0
      %1136 = vdwg.mxu0
      %v1137 = vtanh.pop %v1075
      %v1138 = vtanh.pop %v1078
      %v1139 = vtanh.pop %v1083
      %v1140 = vtanh.pop %v1086
      %v1141 = vtanh.pop %v1091
      %v1142 = vtanh.pop %v1094
      %v1143 = vtanh.pop %v1099
      %v1144 = vtanh.pop %v1102
      %v1145 = vtanh.pop %v1107
      %v1146 = vtanh.pop %v1110
      %v1147 = vtanh.pop %v1115
      %v1148 = vtanh.pop %v1118
      %v1149 = vtanh.pop %v1123
      %v1150 = vtanh.pop %v1126
      %v1151 = vtanh.pop %v1131
      %v1152 = vtanh.pop %v1134
      %1169 = vrot.lane.b32.xlu0 %v1075, 108
      %v1170 = vpop.permute.xlu0 %1169
      %1171 = vrot.lane.b32.xlu0 %v1078, 108
      %v1172 = vpop.permute.xlu0 %1171
      %1173 = vrot.lane.b32.xlu0 %v1083, 108
      %v1174 = vpop.permute.xlu0 %1173
      %1175 = vrot.lane.b32.xlu0 %v1086, 108
      %v1176 = vpop.permute.xlu0 %1175
      %1177 = vrot.lane.b32.xlu0 %v1091, 108
      %v1178 = vpop.permute.xlu0 %1177
      %1179 = vrot.lane.b32.xlu0 %v1094, 108
      %v1180 = vpop.permute.xlu0 %1179
      %1181 = vrot.lane.b32.xlu0 %v1099, 108
      %v1182 = vpop.permute.xlu0 %1181
      %1183 = vrot.lane.b32.xlu0 %v1102, 108
      %v1184 = vpop.permute.xlu0 %1183
      %1185 = vrot.lane.b32.xlu0 %v1107, 108
      %v1186 = vpop.permute.xlu0 %1185
      %1187 = vrot.lane.b32.xlu0 %v1110, 108
      %v1188 = vpop.permute.xlu0 %1187
      %1189 = vrot.lane.b32.xlu0 %v1115, 108
      %v1190 = vpop.permute.xlu0 %1189
      %1191 = vrot.lane.b32.xlu0 %v1118, 108
      %v1192 = vpop.permute.xlu0 %1191
      %1193 = vrot.lane.b32.xlu0 %v1123, 108
      %v1194 = vpop.permute.xlu0 %1193
      %1195 = vrot.lane.b32.xlu0 %v1126, 108
      %v1196 = vpop.permute.xlu0 %1195
      %1197 = vrot.lane.b32.xlu0 %v1131, 108
      %v1198 = vpop.permute.xlu0 %1197
      %1199 = vrot.lane.b32.xlu0 %v1134, 108
      %v1200 = vpop.permute.xlu0 %1199
      %v1217 = vmul.f32 %v1075, %v1170
      %v1218 = vmul.f32 %v1078, %v1172
      %v1219 = vmul.f32 %v1083, %v1174
      %v1220 = vmul.f32 %v1086, %v1176
      %v1221 = vmul.f32 %v1091, %v1178
      %v1222 = vmul.f32 %v1094, %v1180
      %v1223 = vmul.f32 %v1099, %v1182
      %v1224 = vmul.f32 %v1102, %v1184
      %v1225 = vmul.f32 %v1107, %v1186
      %v1226 = vmul.f32 %v1110, %v1188
      %v1227 = vmul.f32 %v1115, %v1190
      %v1228 = vmul.f32 %v1118, %v1192
      %v1229 = vmul.f32 %v1123, %v1194
      %v1230 = vmul.f32 %v1126, %v1196
      %v1231 = vmul.f32 %v1131, %v1198
      %v1232 = vmul.f32 %v1134, %v1200
      %v1233 = vpack.c.bf16 %v1218, %v1217
      %v1234 = vpack.c.bf16 %v1220, %v1219
      %v1235 = vpack.c.bf16 %v1222, %v1221
      %v1236 = vpack.c.bf16 %v1224, %v1223
      %v1237 = vpack.c.bf16 %v1226, %v1225
      %v1238 = vpack.c.bf16 %v1228, %v1227
      %v1239 = vpack.c.bf16 %v1230, %v1229
      %v1240 = vpack.c.bf16 %v1232, %v1231
      %v1241 = vld [vmem:[%s9] sm:$0xf]
      %v1242 = vld [vmem:[%s9 + $0x4] sm:$0xf]
      %v1243 = vld [vmem:[%s9 + $0x8] sm:$0x3]
      %v1247 = vunpack.c.l.b16 %v1241
      %v1248 = vunpack.c.l.b16 %v1242
      %v1249 = vunpack.c.l.b16 %v1243
      %v1250 = vpack.c.b16 %v1248, %v1247
      %v1251 = vpack.c.b16 %v1249, %v1249
      %vm1253 = vcmask 162816
      %v1255 = vsel %vm1253, %v1233, 0
      %v1258 = vsel %vm1253, %v1234, 0
      %v1261 = vsel %vm1253, %v1235, 0
      %v1264 = vsel %vm1253, %v1236, 0
      %v1267 = vsel %vm1253, %v1237, 0
      %v1270 = vsel %vm1253, %v1238, 0
      %v1273 = vsel %vm1253, %v1239, 0
      %v1276 = vsel %vm1253, %v1240, 0
      %vm1278 = vcmask 1041408
      %v1280 = vsel %vm1278, %v1251, 0
      %1282 = vmatprep.subr.bf16.mxu0 0
      %1283 = vmatpush1.bf16.msra.mxu0 %v1250
      %1284 = vmatprep.subr.bf16.mxu0 0
      %1285 = vmatpush1.bf16.msra.mxu0 %v1280
      %1286 = vmatprep.subr.bf16.mxu0 0
      %1287 = vmatpush1.bf16.msra.mxu0 0
      %1288 = vmatprep.subr.bf16.mxu0 0
      %1289 = vmatpush1.bf16.msra.mxu0 0
      %1290 = vmatprep.subr.bf16.mxu0 0
      %1291 = vmatpush1.bf16.msra.mxu0 0
      %1292 = vmatprep.subr.bf16.mxu0 0
      %1293 = vmatpush1.bf16.msra.mxu0 0
      %1294 = vmatprep.subr.bf16.mxu0 0
      %1295 = vmatpush1.bf16.msra.mxu0 0
      %1296 = vmatprep.subr.bf16.mxu0 0
      %1297 = vmatpush1.bf16.msra.mxu0 0
      %1298 = vmatprep.subr.bf16.mxu0 0
      %1299 = vmatpush1.bf16.msra.mxu0 0
      %1300 = vmatprep.subr.bf16.mxu0 0
      %1301 = vmatpush1.bf16.msra.mxu0 0
      %1302 = vmatprep.subr.bf16.mxu0 0
      %1303 = vmatpush1.bf16.msra.mxu0 0
      %1304 = vmatprep.subr.bf16.mxu0 0
      %1305 = vmatpush1.bf16.msra.mxu0 0
      %1306 = vmatprep.subr.bf16.mxu0 0
      %1307 = vmatpush1.bf16.msra.mxu0 0
      %1308 = vmatprep.subr.bf16.mxu0 0
      %1309 = vmatpush1.bf16.msra.mxu0 0
      %1310 = vmatprep.subr.bf16.mxu0 0
      %1311 = vmatpush1.bf16.msra.mxu0 0
      %1312 = vmatprep.subr.bf16.mxu0 0
      %1313 = vmatpush1.bf16.msra.mxu0 0
      %1314 = vmatprep.mubr.bf16.mxu0 0
      %1315 = vmatmul.mubr.bf16.gmra.mrb[0].mxu0 %v1255
      %v1316 = vpop.f32.mrb[0].mxu0
      %v1317 = vadd.f32 0.001, %v1316
      %v1318 = vpop.f32.mrb[0].mxu0
      %v1319 = vpop.f32.mrb[0].mxu0
      %v1320 = vadd.f32 0.001, %v1319
      %v1321 = vpop.f32.mrb[0].mxu0
      %1322 = vmatprep.mubr.bf16.mxu0 0
      %1323 = vmatmul.mubr.bf16.gmra.mrb[0].mxu0 %v1258
      %v1324 = vpop.f32.mrb[0].mxu0
      %v1325 = vadd.f32 0.001, %v1324
      %v1326 = vpop.f32.mrb[0].mxu0
      %v1327 = vpop.f32.mrb[0].mxu0
      %v1328 = vadd.f32 0.001, %v1327
      %v1329 = vpop.f32.mrb[0].mxu0
      %1330 = vmatprep.mubr.bf16.mxu0 0
      %1331 = vmatmul.mubr.bf16.gmra.mrb[0].mxu0 %v1261
      %v1332 = vpop.f32.mrb[0].mxu0
      %v1333 = vadd.f32 0.001, %v1332
      %v1334 = vpop.f32.mrb[0].mxu0
      %v1335 = vpop.f32.mrb[0].mxu0
      %v1336 = vadd.f32 0.001, %v1335
      %v1337 = vpop.f32.mrb[0].mxu0
      %1338 = vmatprep.mubr.bf16.mxu0 0
      %1339 = vmatmul.mubr.bf16.gmra.mrb[0].mxu0 %v1264
      %v1340 = vpop.f32.mrb[0].mxu0
      %v1341 = vadd.f32 0.001, %v1340
      %v1342 = vpop.f32.mrb[0].mxu0
      %v1343 = vpop.f32.mrb[0].mxu0
      %v1344 = vadd.f32 0.001, %v1343
      %v1345 = vpop.f32.mrb[0].mxu0
      %1346 = vmatprep.mubr.bf16.mxu0 0
      %1347 = vmatmul.mubr.bf16.gmra.mrb[0].mxu0 %v1267
      %v1348 = vpop.f32.mrb[0].mxu0
      %v1349 = vadd.f32 0.001, %v1348
      %v1350 = vpop.f32.mrb[0].mxu0
      %v1351 = vpop.f32.mrb[0].mxu0
      %v1352 = vadd.f32 0.001, %v1351
      %v1353 = vpop.f32.mrb[0].mxu0
      %1354 = vmatprep.mubr.bf16.mxu0 0
      %1355 = vmatmul.mubr.bf16.gmra.mrb[0].mxu0 %v1270
      %v1356 = vpop.f32.mrb[0].mxu0
      %v1357 = vadd.f32 0.001, %v1356
      %v1358 = vpop.f32.mrb[0].mxu0
      %v1359 = vpop.f32.mrb[0].mxu0
      %v1360 = vadd.f32 0.001, %v1359
      %v1361 = vpop.f32.mrb[0].mxu0
      %1362 = vmatprep.mubr.bf16.mxu0 0
      %1363 = vmatmul.mubr.bf16.gmra.mrb[0].mxu0 %v1273
      %v1364 = vpop.f32.mrb[0].mxu0
      %v1365 = vadd.f32 0.001, %v1364
      %v1366 = vpop.f32.mrb[0].mxu0
      %v1367 = vpop.f32.mrb[0].mxu0
      %v1368 = vadd.f32 0.001, %v1367
      %v1369 = vpop.f32.mrb[0].mxu0
      %1370 = vmatprep.mubr.bf16.mxu0 0
      %1371 = vmatmul.mubr.bf16.gmra.mrb[0].mxu0 %v1276
      %v1372 = vpop.f32.mrb[0].mxu0
      %v1373 = vadd.f32 0.001, %v1372
      %v1374 = vpop.f32.mrb[0].mxu0
      %v1375 = vpop.f32.mrb[0].mxu0
      %v1376 = vadd.f32 0.001, %v1375
      %v1377 = vpop.f32.mrb[0].mxu0
      %1378 = vdwg.mxu0
      %1395 = vrot.lane.b32.xlu0 %v1137, 88
      %v1396 = vpop.permute.xlu0 %1395
      %1397 = vrot.lane.b32.xlu0 %v1138, 88
      %v1398 = vpop.permute.xlu0 %1397
      %1399 = vrot.lane.b32.xlu0 %v1139, 88
      %v1400 = vpop.permute.xlu0 %1399
      %1401 = vrot.lane.b32.xlu0 %v1140, 88
      %v1402 = vpop.permute.xlu0 %1401
      %1403 = vrot.lane.b32.xlu0 %v1141, 88
      %v1404 = vpop.permute.xlu0 %1403
      %1405 = vrot.lane.b32.xlu0 %v1142, 88
      %v1406 = vpop.permute.xlu0 %1405
      %1407 = vrot.lane.b32.xlu0 %v1143, 88
      %v1408 = vpop.permute.xlu0 %1407
      %1409 = vrot.lane.b32.xlu0 %v1144, 88
      %v1410 = vpop.permute.xlu0 %1409
      %1411 = vrot.lane.b32.xlu0 %v1145, 88
      %v1412 = vpop.permute.xlu0 %1411
      %1413 = vrot.lane.b32.xlu0 %v1146, 88
      %v1414 = vpop.permute.xlu0 %1413
      %1415 = vrot.lane.b32.xlu0 %v1147, 88
      %v1416 = vpop.permute.xlu0 %1415
      %1417 = vrot.lane.b32.xlu0 %v1148, 88
      %v1418 = vpop.permute.xlu0 %1417
      %1419 = vrot.lane.b32.xlu0 %v1149, 88
      %v1420 = vpop.permute.xlu0 %1419
      %1421 = vrot.lane.b32.xlu0 %v1150, 88
      %v1422 = vpop.permute.xlu0 %1421
      %1423 = vrot.lane.b32.xlu0 %v1151, 88
      %v1424 = vpop.permute.xlu0 %1423
      %1425 = vrot.lane.b32.xlu0 %v1152, 88
      %v1426 = vpop.permute.xlu0 %1425
      %1459 = vrot.lane.b32.xlu0 %v1317, 4
      %v1460 = vpop.permute.xlu0 %1459
      %1461 = vrot.lane.b32.xlu0 %v1320, 4
      %v1462 = vpop.permute.xlu0 %1461
      %1463 = vrot.lane.b32.xlu0 %v1325, 4
      %v1464 = vpop.permute.xlu0 %1463
      %1465 = vrot.lane.b32.xlu0 %v1328, 4
      %v1466 = vpop.permute.xlu0 %1465
      %1467 = vrot.lane.b32.xlu0 %v1333, 4
      %v1468 = vpop.permute.xlu0 %1467
      %1469 = vrot.lane.b32.xlu0 %v1336, 4
      %v1470 = vpop.permute.xlu0 %1469
      %1471 = vrot.lane.b32.xlu0 %v1341, 4
      %v1472 = vpop.permute.xlu0 %1471
      %1473 = vrot.lane.b32.xlu0 %v1344, 4
      %v1474 = vpop.permute.xlu0 %1473
      %1475 = vrot.lane.b32.xlu0 %v1349, 4
      %v1476 = vpop.permute.xlu0 %1475
      %1477 = vrot.lane.b32.xlu0 %v1352, 4
      %v1478 = vpop.permute.xlu0 %1477
      %1479 = vrot.lane.b32.xlu0 %v1357, 4
      %v1480 = vpop.permute.xlu0 %1479
      %1481 = vrot.lane.b32.xlu0 %v1360, 4
      %v1482 = vpop.permute.xlu0 %1481
      %1483 = vrot.lane.b32.xlu0 %v1365, 4
      %v1484 = vpop.permute.xlu0 %1483
      %1485 = vrot.lane.b32.xlu0 %v1368, 4
      %v1486 = vpop.permute.xlu0 %1485
      %1487 = vrot.lane.b32.xlu0 %v1373, 4
      %v1488 = vpop.permute.xlu0 %1487
      %1489 = vrot.lane.b32.xlu0 %v1376, 4
      %v1490 = vpop.permute.xlu0 %1489
      %vm1507 = vcmask 31744
      %v1508 = vsel %vm1507, %v1396, %v1460
      %v1509 = vsel %vm1507, %v1398, %v1462
      %v1510 = vsel %vm1507, %v1400, %v1464
      %v1511 = vsel %vm1507, %v1402, %v1466
      %v1512 = vsel %vm1507, %v1404, %v1468
      %v1513 = vsel %vm1507, %v1406, %v1470
      %v1514 = vsel %vm1507, %v1408, %v1472
      %v1515 = vsel %vm1507, %v1410, %v1474
      %v1516 = vsel %vm1507, %v1412, %v1476
      %v1517 = vsel %vm1507, %v1414, %v1478
      %v1518 = vsel %vm1507, %v1416, %v1480
      %v1519 = vsel %vm1507, %v1418, %v1482
      %v1520 = vsel %vm1507, %v1420, %v1484
      %v1521 = vsel %vm1507, %v1422, %v1486
      %v1522 = vsel %vm1507, %v1424, %v1488
      %v1523 = vsel %vm1507, %v1426, %v1490
      %1524 = vst.msk [vmem:[%s361] sm:$0xff] %vm1253, %v1508
      %1525 = vst.msk [vmem:[%s361 + $0x8] sm:$0xff] %vm1253, %v1509
      %1526 = vst.msk [vmem:[%s361 + $0x10] sm:$0xff] %vm1253, %v1510
      %1527 = vst.msk [vmem:[%s361 + $0x18] sm:$0xff] %vm1253, %v1511
      %1528 = vst.msk [vmem:[%s361 + $0x20] sm:$0xff] %vm1253, %v1512
      %1529 = vst.msk [vmem:[%s361 + $0x28] sm:$0xff] %vm1253, %v1513
      %1530 = vst.msk [vmem:[%s361 + $0x30] sm:$0xff] %vm1253, %v1514
      %1531 = vst.msk [vmem:[%s361 + $0x38] sm:$0xff] %vm1253, %v1515
      %1532 = vst.msk [vmem:[%s361 + $0x40] sm:$0xff] %vm1253, %v1516
      %1533 = vst.msk [vmem:[%s361 + $0x48] sm:$0xff] %vm1253, %v1517
      %1534 = vst.msk [vmem:[%s361 + $0x50] sm:$0xff] %vm1253, %v1518
      %1535 = vst.msk [vmem:[%s361 + $0x58] sm:$0xff] %vm1253, %v1519
      %1536 = vst.msk [vmem:[%s361 + $0x60] sm:$0xff] %vm1253, %v1520
      %1537 = vst.msk [vmem:[%s361 + $0x68] sm:$0xff] %vm1253, %v1521
      %1538 = vst.msk [vmem:[%s361 + $0x70] sm:$0xff] %vm1253, %v1522
      %1539 = vst.msk [vmem:[%s361 + $0x78] sm:$0xff] %vm1253, %v1523
      %s1540 = smul.u32 16, %s21
      %p1541 = scmp.lt.s32.totalorder %s1540, 31
      %s1542 = scalar_select %p1541, %s1540, 31
      %s1543 = smul.addr %s1542, 8
      %s1544 = scalar_lea.vmem %s10, %s1543
      // Predicated region
      $region61: #{tpu_custom_call.1} parent=59 // pred_check
        %p1545 = pneg %p254
      $region62: #{tpu_custom_call.1} parent=59 // pred_check_branch
        %1547 = sbr.rel (%p1545) target = $region64
      $region63: #{tpu_custom_call.1} parent=59 // pred_region
        %s1548 = smul.u32 16, %s21
      $region64: #{tpu_custom_call.1} parent=59 // pred_fallthru
        _
    $region60: #{tpu_custom_call.1} parent=5 // pred_fallthru
      _
    %p1549 = scmp.le.s32.totalorder 2, %s16
    // Predicated region
    $region65: #{tpu_custom_call.1} parent=5 // pred_check
      %p1550 = pneg %p1549
    $region66: #{tpu_custom_call.1} parent=5 // pred_check_branch
      %1552 = sbr.rel (%p1550) target = $region68
    $region67: #{tpu_custom_call.1} parent=5 // pred_region
      %s1553 = ssub.s32 %s16, 2
      // Predicated region
      $region69: #{tpu_custom_call.1} parent=67 // pred_check
        %p1554 = pneg %p260
      $region70: #{tpu_custom_call.1} parent=67 // pred_check_branch
        %1556 = sbr.rel (%p1554) target = $region72
      $region71: #{tpu_custom_call.1} parent=67 // pred_region
        %s1557 = smul.u32 16, %s22
        %p1558 = scmp.lt.s32.totalorder %s1557, 31
        %s1559 = scalar_select %p1558, %s1557, 31
        %s1560 = smul.addr %s1559, 8
        %s1561 = scalar_lea.vmem %s10, %s1560
      $region72: #{tpu_custom_call.1} parent=67 // pred_fallthru
        _
    $region68: #{tpu_custom_call.1} parent=5 // pred_fallthru
      _
  $region6: #{tpu_custom_call.1} parent=0 // loop_footer
    %s20 = sadd.s32 1, %s16
  $region7: #{tpu_custom_call.1} parent=0 // loop_footer_branch
    %15 = sbr.rel target = $region3
  $region8: #{tpu_custom_call.1} parent=0 // loop_exit
    _

</llo_original>
